<compile_context>
chip_gen: v5e
topology: v5e:2x2
jax: 0.10.0
libtpu: 0.0.40
codegen_flags: <defaults>
</compile_context>

<pallas_src>
import jax
import jax.numpy as jnp
from jax.experimental import pallas as pl
from jax.experimental.pallas import tpu as pltpu


# --------------------------------------------------------------------------- #
# Fused kernel: stage1 -> stage2 -> stage3 entirely in VMEM.
#
# Activation invariant entering stage i (0-based):
#   rows  = (h, kh_1..kh_i, w)                 (row-major)
#   lanes = (kw_1..kw_i, c_i)  with c minor    (width == C for every stage)
# Each stage does, per output-row parity kh_{i+1}:
#   y = relu( (A @ What[i, kh]) * scale + shift )        # (rows, C) lane-dense
# and interleaves kh_{i+1} into the row axis via an integer-indexed store.
# --------------------------------------------------------------------------- #
def _uphead8x_fused_kernel(x_ref, w_ref, s_ref, b_ref, o_ref, buf1, buf2):
    # x_ref : (1, th*W, C)        input pixels, rows=(h, w), lanes=c          (f32)
    # w_ref : (3, 2, C, C)        per-stage, per-kh packed weights            (bf16)
    # s_ref : (3, 1, C)           folded-BN scale per packed output lane      (f32)
    # b_ref : (3, 1, C)           folded-BN shift per packed output lane      (f32)
    # o_ref : (1, 4*th, 2, W, C)  free row-major reshape of NHWC (8th,8W,C/8) (f32)
    # buf1  : (th,   2, W, C)     stage-1 acts, rows=(h,kh1,w),     lanes=(kw1,c1)
    # buf2  : (2*th, 2, W, C)     stage-2 acts, rows=(h,kh1,kh2,w), lanes=(kw1,kw2,c2)
    C = x_ref.shape[-1]
    th = buf1.shape[0]
    W = buf1.shape[2]

    def run_stage(a2d, stage, store):
        # a2d: (G*W, C) with rows=(h, kh-bits, w), lanes=(kw-bits, c)
        g = a2d.shape[0] // W
        a_bf = a2d.astype(jnp.bfloat16)          # MXU-native operands
        scale = s_ref[stage]                     # (1, C), f32
        shift = b_ref[stage]                     # (1, C), f32
        for kh in range(2):                      # two lane-dense matmuls per stage
            y = jnp.dot(a_bf, w_ref[stage, kh],
                        preferred_element_type=jnp.float32)   # (G*W, C) on the MXU
            y = jnp.maximum(y * scale + shift, 0.0)            # folded BN + ReLU (f32)
            store(kh, y.reshape(g, W, C))

    def store1(kh, v):
        buf1[:, kh, :, :] = v

    def store2(kh, v):
        buf2[:, kh, :, :] = v

    def store3(kh, v):
        o_ref[0, :, kh, :, :] = v

    run_stage(x_ref[0], 0, store1)
    run_stage(buf1[...].reshape(2 * th * W, C), 1, store2)
    run_stage(buf2[...].reshape(4 * th * W, C), 2, store3)


# --------------------------------------------------------------------------- #
# Parameter construction / packing (host side, done once).
# --------------------------------------------------------------------------- #
def init_uphead8x_params(key, in_channels, eps=1e-3):
    """Synthetic ConvTranspose2d / BatchNorm2d parameters (PyTorch layouts).

    eps=1e-3 matches the module spec: nn.BatchNorm2d(..., eps=0.001, momentum=0.01).
    """
    params = []
    c = in_channels
    for _ in range(3):
        cin, cout = c, c // 2
        key, k1, k2, k3, k4, k5 = jax.random.split(key, 6)
        w_pt = 0.1 * jax.random.normal(k1, (cin, cout, 2, 2), jnp.float32)  # (Cin, Cout, kH, kW)
        gamma = 1.0 + 0.1 * jax.random.normal(k2, (cout,), jnp.float32)
        beta = 0.1 * jax.random.normal(k3, (cout,), jnp.float32)
        running_mean = 0.1 * jax.random.normal(k4, (cout,), jnp.float32)
        running_var = jnp.abs(jax.random.normal(k5, (cout,), jnp.float32)) + 0.5
        scale = gamma / jnp.sqrt(running_var + eps)
        shift = beta - running_mean * scale
        params.append({"w": w_pt, "scale": scale, "shift": shift})
        c = cout
    return params


def pack_uphead8x_params(raw_params):
    """Pack the 3 stages for the fused kernel.

    Stage i (0-based) consumes activations whose lane axis is (kw_1..kw_i, c_i):
    the kw tap bits of earlier stages are packed above the channel.  The packed
    weight for output-row parity kh is block-diagonal over those 2**i
    pass-through kw combinations, giving a (C, C) matrix whose output lanes are
    (kw_1..kw_i, kw_{i+1}, c_{i+1}).  BN scale/shift are tiled to that layout.
    """
    w_stages, s_stages, b_stages = [], [], []
    for i, p in enumerate(raw_params):
        n_pass = 2 ** i
        w_pt = p["w"]                                      # (Cin, Cout, 2, 2)
        cin, cout = w_pt.shape[0], w_pt.shape[1]
        eye = jnp.eye(n_pass, dtype=w_pt.dtype)
        halves = []
        for kh in range(2):
            # columns = (kw, c) with c minor
            blk = jnp.transpose(w_pt[:, :, kh, :], (0, 2, 1)).reshape(cin, 2 * cout)
            halves.append(jnp.kron(eye, blk))              # (n_pass*Cin, n_pass*2*Cout) == (C, C)
        w_stages.append(jnp.stack(halves, axis=0))         # (2, C, C)
        s_stages.append(jnp.tile(p["scale"], 2 * n_pass)[None, :])   # (1, C)
        b_stages.append(jnp.tile(p["shift"], 2 * n_pass)[None, :])   # (1, C)
    return {
        "w": jnp.stack(w_stages, axis=0).astype(jnp.bfloat16),   # (3, 2, C, C)
        "scale": jnp.stack(s_stages, axis=0),                    # (3, 1, C)
        "shift": jnp.stack(b_stages, axis=0),                    # (3, 1, C)
    }


# --------------------------------------------------------------------------- #
# Wrapper.
# --------------------------------------------------------------------------- #
def _pick_tile_h(H, W, C, budget_bytes=24 * 1024 * 1024):
    # ~40 resident f32 per input-tile element: double-buffered input (2) and
    # output (16) tiles, stage scratch (6), weights and in-flight temporaries.
    # Budget keeps the fused kernel comfortably inside v7x's 64 MiB VMEM.
    def est(th):
        return 40 * 4 * th * W * C

    for cand in range(H, 0, -1):
        if H % cand == 0 and est(cand) <= budget_bytes:
            return cand
    return 1


@jax.jit
def uphead8x_forward(x_nchw, packed):
    """UpHead8x.forward: NCHW in -> NCHW out; C -> C//8, (H, W) -> (8H, 8W)."""
    N, C, H, W = x_nchw.shape
    assert C % 8 == 0
    w_all, s_all, b_all = packed["w"], packed["scale"], packed["shift"]

    # NHWC with pixels flattened -> the kernel's stage-1 matmul input needs no
    # in-kernel reshape.
    x_flat = jnp.transpose(x_nchw, (0, 2, 3, 1)).reshape(N, H * W, C)

    th = _pick_tile_h(H, W, C)
    grid = (N, H // th)          # batch stays a parallel axis (v7x: 2 TC/chip)

    out = pl.pallas_call(
        _uphead8x_fused_kernel,
        out_shape=jax.ShapeDtypeStruct((N, 4 * H, 2, W, C), jnp.float32),
        grid_spec=pltpu.PrefetchScalarGridSpec(
            num_scalar_prefetch=0,
            grid=grid,
            in_specs=[
                pl.BlockSpec((1, th * W, C), lambda n, h: (n, h, 0)),
                pl.BlockSpec((3, 2, C, C), lambda n, h: (0, 0, 0, 0)),
                pl.BlockSpec((3, 1, C), lambda n, h: (0, 0, 0)),
                pl.BlockSpec((3, 1, C), lambda n, h: (0, 0, 0)),
            ],
            out_specs=pl.BlockSpec((1, 4 * th, 2, W, C),
                                   lambda n, h: (n, h, 0, 0, 0)),
            scratch_shapes=[
                pltpu.VMEM((th, 2, W, C), jnp.float32),       # stage-1 activations
                pltpu.VMEM((2 * th, 2, W, C), jnp.float32),   # stage-2 activations
            ],
        ),
        compiler_params=pltpu.CompilerParams(
            dimension_semantics=("parallel", "parallel"),
            vmem_limit_bytes=48 * 1024 * 1024,
        ),
    )(x_flat, w_all, s_all, b_all)

    # (N, 4H, 2, W, C) is a row-major (free) reshape of NHWC (N, 8H, 8W, C//8):
    #   rows : ((h, kh1, kh2), kh3)          == 8h + 4kh1 + 2kh2 + kh3
    #   cols : (w, (kw1, kw2, kw3, c))       == (8w + 4kw1 + 2kw2 + kw3, c)
    y_nhwc = out.reshape(N, 8 * H, 8 * W, C // 8)

    # NHWC -> NCHW only to match the PyTorch module interface; downstream NHWC
    # consumers should take y_nhwc directly and skip this relayout.
    return jnp.transpose(y_nhwc, (0, 3, 1, 2))


# --------------------------------------------------------------------------- #
# Pure-JAX (XLA) reference for validation.
# --------------------------------------------------------------------------- #
def uphead8x_reference(x_nchw, raw_params):
    x = jnp.transpose(x_nchw, (0, 2, 3, 1))    # NHWC
    for p in raw_params:
        n, h, w, _ = x.shape
        cout = p["w"].shape[1]
        y = jnp.einsum("nhwi,iokl->nhkwlo", x, p["w"])    # (N, H, kh, W, kw, Cout)
        y = y.reshape(n, 2 * h, 2 * w, cout)
        y = jnp.maximum(y * p["scale"] + p["shift"], 0.0)
        x = y
    return jnp.transpose(x, (0, 3, 1, 2))


if __name__ == "__main__":
    key = jax.random.PRNGKey(0)
    k_params, k_x = jax.random.split(key)

    N, C, H, W = 2, 32, 8, 8
    x = jax.random.normal(k_x, (N, C, H, W), jnp.float32)

    raw_params = init_uphead8x_params(k_params, C)
    packed = pack_uphead8x_params(raw_params)

    y = uphead8x_forward(x, packed)
    y = jax.block_until_ready(y)

    assert y.shape == (N, C // 8, 8 * H, 8 * W), y.shape
    assert y.dtype == jnp.float32

    y_ref = jax.block_until_ready(uphead8x_reference(x, raw_params))
    max_err = float(jnp.max(jnp.abs(y - y_ref)))
    assert max_err < 1e-1, f"max abs error vs reference: {max_err}"

    print("KERNEL_OK")
</pallas_src>

<mosaic_0001>
module attributes {stable_mosaic.version = 11 : i64} {
  func.func @_uphead8x_fused_kernel(%arg0: i32, %arg1: i32, %arg2: memref<1x64x32xf32, #tpu.memory_space<vmem>>, %arg3: memref<3x2x32x32xbf16, #tpu.memory_space<vmem>>, %arg4: memref<3x1x32xf32, #tpu.memory_space<vmem>>, %arg5: memref<3x1x32xf32, #tpu.memory_space<vmem>>, %arg6: memref<1x32x2x8x32xf32, #tpu.memory_space<vmem>>, %arg7: memref<8x2x8x32xf32, #tpu.memory_space<vmem>>, %arg8: memref<16x2x8x32xf32, #tpu.memory_space<vmem>>) attributes {dimension_semantics = [#tpu.dimension_semantics<parallel>, #tpu.dimension_semantics<parallel>], iteration_bounds = array<i64: 2, 1>, scalar_prefetch = 0 : i64, scratch_operands = 2 : i64, tpu.core_type = #tpu.core_type<tc>, window_params = [{transform_indices = @transform_0, window_bounds = array<i64: 1, 64, 32>}, {pipeline_mode = #tpu.pipeline_mode<synchronous>, transform_indices = @transform_1, window_bounds = array<i64: 3, 2, 32, 32>}, {pipeline_mode = #tpu.pipeline_mode<synchronous>, transform_indices = @transform_2, window_bounds = array<i64: 3, 1, 32>}, {pipeline_mode = #tpu.pipeline_mode<synchronous>, transform_indices = @transform_3, window_bounds = array<i64: 3, 1, 32>}, {transform_indices = @transform_4, window_bounds = array<i64: 1, 32, 2, 8, 32>}]} {
    %c0 = arith.constant 0 : index
    %c0_0 = arith.constant 0 : index
    %c0_1 = arith.constant 0 : index
    %0 = vector.load %arg2[%c0, %c0_0, %c0_1] : memref<1x64x32xf32, #tpu.memory_space<vmem>>, vector<1x64x32xf32>
    %1 = vector.shape_cast %0 : vector<1x64x32xf32> to vector<64x32xf32>
    %2 = arith.truncf %1 : vector<64x32xf32> to vector<64x32xbf16>
    %c0_2 = arith.constant 0 : index
    %c0_3 = arith.constant 0 : index
    %c0_4 = arith.constant 0 : index
    %3 = vector.load %arg4[%c0_2, %c0_3, %c0_4] : memref<3x1x32xf32, #tpu.memory_space<vmem>>, vector<1x1x32xf32>
    %4 = vector.shape_cast %3 : vector<1x1x32xf32> to vector<1x32xf32>
    %c0_5 = arith.constant 0 : index
    %c0_6 = arith.constant 0 : index
    %c0_7 = arith.constant 0 : index
    %5 = vector.load %arg5[%c0_5, %c0_6, %c0_7] : memref<3x1x32xf32, #tpu.memory_space<vmem>>, vector<1x1x32xf32>
    %6 = vector.shape_cast %5 : vector<1x1x32xf32> to vector<1x32xf32>
    %c0_8 = arith.constant 0 : index
    %c0_9 = arith.constant 0 : index
    %c0_10 = arith.constant 0 : index
    %c0_11 = arith.constant 0 : index
    %7 = vector.load %arg3[%c0_8, %c0_9, %c0_10, %c0_11] : memref<3x2x32x32xbf16, #tpu.memory_space<vmem>>, vector<1x1x32x32xbf16>
    %8 = vector.shape_cast %7 : vector<1x1x32x32xbf16> to vector<32x32xbf16>
    %cst = arith.constant dense<0.000000e+00> : vector<64x32xf32>
    %9 = tpu.matmul %2, %8, %cst {dimension_numbers = #tpu.dot_dimension_numbers<[1], [0], [0], [1], [0, 0, 1, 1], [], []>} : vector<64x32xbf16>, vector<32x32xbf16>, vector<64x32xf32> -> vector<64x32xf32>
    %10 = vector.broadcast %4 : vector<1x32xf32> to vector<64x32xf32>
    %11 = arith.mulf %9, %10 : vector<64x32xf32>
    %12 = vector.broadcast %6 : vector<1x32xf32> to vector<64x32xf32>
    %13 = arith.addf %11, %12 : vector<64x32xf32>
    %cst_12 = arith.constant 0.000000e+00 : f32
    %14 = vector.broadcast %cst_12 : f32 to vector<64x32xf32>
    %15 = arith.maximumf %13, %14 : vector<64x32xf32>
    %16 = vector.shape_cast %15 : vector<64x32xf32> to vector<8x8x32xf32>
    %c0_13 = arith.constant 0 : index
    %c0_14 = arith.constant 0 : index
    %c0_15 = arith.constant 0 : index
    %c0_16 = arith.constant 0 : index
    %17 = vector.load %arg7[%c0_13, %c0_14, %c0_15, %c0_16] : memref<8x2x8x32xf32, #tpu.memory_space<vmem>>, vector<8x1x8x32xf32>
    %18 = vector.shape_cast %17 : vector<8x1x8x32xf32> to vector<8x8x32xf32>
    %19 = vector.shape_cast %16 : vector<8x8x32xf32> to vector<8x1x8x32xf32>
    tpu.vector_store %arg7[%c0_13, %c0_14, %c0_15, %c0_16], %19 {strides = array<i32>} : memref<8x2x8x32xf32, #tpu.memory_space<vmem>>, vector<8x1x8x32xf32>,
    %c0_17 = arith.constant 0 : index
    %c1 = arith.constant 1 : index
    %c0_18 = arith.constant 0 : index
    %c0_19 = arith.constant 0 : index
    %20 = vector.load %arg3[%c0_17, %c1, %c0_18, %c0_19] : memref<3x2x32x32xbf16, #tpu.memory_space<vmem>>, vector<1x1x32x32xbf16>
    %21 = vector.shape_cast %20 : vector<1x1x32x32xbf16> to vector<32x32xbf16>
    %cst_20 = arith.constant dense<0.000000e+00> : vector<64x32xf32>
    %22 = tpu.matmul %2, %21, %cst_20 {dimension_numbers = #tpu.dot_dimension_numbers<[1], [0], [0], [1], [0, 0, 1, 1], [], []>} : vector<64x32xbf16>, vector<32x32xbf16>, vector<64x32xf32> -> vector<64x32xf32>
    %23 = vector.broadcast %4 : vector<1x32xf32> to vector<64x32xf32>
    %24 = arith.mulf %22, %23 : vector<64x32xf32>
    %25 = vector.broadcast %6 : vector<1x32xf32> to vector<64x32xf32>
    %26 = arith.addf %24, %25 : vector<64x32xf32>
    %cst_21 = arith.constant 0.000000e+00 : f32
    %27 = vector.broadcast %cst_21 : f32 to vector<64x32xf32>
    %28 = arith.maximumf %26, %27 : vector<64x32xf32>
    %29 = vector.shape_cast %28 : vector<64x32xf32> to vector<8x8x32xf32>
    %c0_22 = arith.constant 0 : index
    %c1_23 = arith.constant 1 : index
    %c0_24 = arith.constant 0 : index
    %c0_25 = arith.constant 0 : index
    %30 = vector.load %arg7[%c0_22, %c1_23, %c0_24, %c0_25] : memref<8x2x8x32xf32, #tpu.memory_space<vmem>>, vector<8x1x8x32xf32>
    %31 = vector.shape_cast %30 : vector<8x1x8x32xf32> to vector<8x8x32xf32>
    %32 = vector.shape_cast %29 : vector<8x8x32xf32> to vector<8x1x8x32xf32>
    tpu.vector_store %arg7[%c0_22, %c1_23, %c0_24, %c0_25], %32 {strides = array<i32>} : memref<8x2x8x32xf32, #tpu.memory_space<vmem>>, vector<8x1x8x32xf32>,
    %c0_26 = arith.constant 0 : index
    %c0_27 = arith.constant 0 : index
    %c0_28 = arith.constant 0 : index
    %c0_29 = arith.constant 0 : index
    %33 = vector.load %arg7[%c0_26, %c0_27, %c0_28, %c0_29] : memref<8x2x8x32xf32, #tpu.memory_space<vmem>>, vector<8x2x8x32xf32>
    %34 = vector.shape_cast %33 : vector<8x2x8x32xf32> to vector<128x32xf32>
    %35 = arith.truncf %34 : vector<128x32xf32> to vector<128x32xbf16>
    %c1_30 = arith.constant 1 : index
    %c0_31 = arith.constant 0 : index
    %c0_32 = arith.constant 0 : index
    %36 = vector.load %arg4[%c1_30, %c0_31, %c0_32] : memref<3x1x32xf32, #tpu.memory_space<vmem>>, vector<1x1x32xf32>
    %37 = vector.shape_cast %36 : vector<1x1x32xf32> to vector<1x32xf32>
    %c1_33 = arith.constant 1 : index
    %c0_34 = arith.constant 0 : index
    %c0_35 = arith.constant 0 : index
    %38 = vector.load %arg5[%c1_33, %c0_34, %c0_35] : memref<3x1x32xf32, #tpu.memory_space<vmem>>, vector<1x1x32xf32>
    %39 = vector.shape_cast %38 : vector<1x1x32xf32> to vector<1x32xf32>
    %c1_36 = arith.constant 1 : index
    %c0_37 = arith.constant 0 : index
    %c0_38 = arith.constant 0 : index
    %c0_39 = arith.constant 0 : index
    %40 = vector.load %arg3[%c1_36, %c0_37, %c0_38, %c0_39] : memref<3x2x32x32xbf16, #tpu.memory_space<vmem>>, vector<1x1x32x32xbf16>
    %41 = vector.shape_cast %40 : vector<1x1x32x32xbf16> to vector<32x32xbf16>
    %cst_40 = arith.constant dense<0.000000e+00> : vector<128x32xf32>
    %42 = tpu.matmul %35, %41, %cst_40 {dimension_numbers = #tpu.dot_dimension_numbers<[1], [0], [0], [1], [0, 0, 1, 1], [], []>} : vector<128x32xbf16>, vector<32x32xbf16>, vector<128x32xf32> -> vector<128x32xf32>
    %43 = vector.broadcast %37 : vector<1x32xf32> to vector<128x32xf32>
    %44 = arith.mulf %42, %43 : vector<128x32xf32>
    %45 = vector.broadcast %39 : vector<1x32xf32> to vector<128x32xf32>
    %46 = arith.addf %44, %45 : vector<128x32xf32>
    %cst_41 = arith.constant 0.000000e+00 : f32
    %47 = vector.broadcast %cst_41 : f32 to vector<128x32xf32>
    %48 = arith.maximumf %46, %47 : vector<128x32xf32>
    %49 = vector.shape_cast %48 : vector<128x32xf32> to vector<16x8x32xf32>
    %c0_42 = arith.constant 0 : index
    %c0_43 = arith.constant 0 : index
    %c0_44 = arith.constant 0 : index
    %c0_45 = arith.constant 0 : index
    %50 = vector.load %arg8[%c0_42, %c0_43, %c0_44, %c0_45] : memref<16x2x8x32xf32, #tpu.memory_space<vmem>>, vector<16x1x8x32xf32>
    %51 = vector.shape_cast %50 : vector<16x1x8x32xf32> to vector<16x8x32xf32>
    %52 = vector.shape_cast %49 : vector<16x8x32xf32> to vector<16x1x8x32xf32>
    tpu.vector_store %arg8[%c0_42, %c0_43, %c0_44, %c0_45], %52 {strides = array<i32>} : memref<16x2x8x32xf32, #tpu.memory_space<vmem>>, vector<16x1x8x32xf32>,
    %c1_46 = arith.constant 1 : index
    %c1_47 = arith.constant 1 : index
    %c0_48 = arith.constant 0 : index
    %c0_49 = arith.constant 0 : index
    %53 = vector.load %arg3[%c1_46, %c1_47, %c0_48, %c0_49] : memref<3x2x32x32xbf16, #tpu.memory_space<vmem>>, vector<1x1x32x32xbf16>
    %54 = vector.shape_cast %53 : vector<1x1x32x32xbf16> to vector<32x32xbf16>
    %cst_50 = arith.constant dense<0.000000e+00> : vector<128x32xf32>
    %55 = tpu.matmul %35, %54, %cst_50 {dimension_numbers = #tpu.dot_dimension_numbers<[1], [0], [0], [1], [0, 0, 1, 1], [], []>} : vector<128x32xbf16>, vector<32x32xbf16>, vector<128x32xf32> -> vector<128x32xf32>
    %56 = vector.broadcast %37 : vector<1x32xf32> to vector<128x32xf32>
    %57 = arith.mulf %55, %56 : vector<128x32xf32>
    %58 = vector.broadcast %39 : vector<1x32xf32> to vector<128x32xf32>
    %59 = arith.addf %57, %58 : vector<128x32xf32>
    %cst_51 = arith.constant 0.000000e+00 : f32
    %60 = vector.broadcast %cst_51 : f32 to vector<128x32xf32>
    %61 = arith.maximumf %59, %60 : vector<128x32xf32>
    %62 = vector.shape_cast %61 : vector<128x32xf32> to vector<16x8x32xf32>
    %c0_52 = arith.constant 0 : index
    %c1_53 = arith.constant 1 : index
    %c0_54 = arith.constant 0 : index
    %c0_55 = arith.constant 0 : index
    %63 = vector.load %arg8[%c0_52, %c1_53, %c0_54, %c0_55] : memref<16x2x8x32xf32, #tpu.memory_space<vmem>>, vector<16x1x8x32xf32>
    %64 = vector.shape_cast %63 : vector<16x1x8x32xf32> to vector<16x8x32xf32>
    %65 = vector.shape_cast %62 : vector<16x8x32xf32> to vector<16x1x8x32xf32>
    tpu.vector_store %arg8[%c0_52, %c1_53, %c0_54, %c0_55], %65 {strides = array<i32>} : memref<16x2x8x32xf32, #tpu.memory_space<vmem>>, vector<16x1x8x32xf32>,
    %c0_56 = arith.constant 0 : index
    %c0_57 = arith.constant 0 : index
    %c0_58 = arith.constant 0 : index
    %c0_59 = arith.constant 0 : index
    %66 = vector.load %arg8[%c0_56, %c0_57, %c0_58, %c0_59] : memref<16x2x8x32xf32, #tpu.memory_space<vmem>>, vector<16x2x8x32xf32>
    %67 = vector.shape_cast %66 : vector<16x2x8x32xf32> to vector<256x32xf32>
    %68 = arith.truncf %67 : vector<256x32xf32> to vector<256x32xbf16>
    %c2 = arith.constant 2 : index
    %c0_60 = arith.constant 0 : index
    %c0_61 = arith.constant 0 : index
    %69 = vector.load %arg4[%c2, %c0_60, %c0_61] : memref<3x1x32xf32, #tpu.memory_space<vmem>>, vector<1x1x32xf32>
    %70 = vector.shape_cast %69 : vector<1x1x32xf32> to vector<1x32xf32>
    %c2_62 = arith.constant 2 : index
    %c0_63 = arith.constant 0 : index
    %c0_64 = arith.constant 0 : index
    %71 = vector.load %arg5[%c2_62, %c0_63, %c0_64] : memref<3x1x32xf32, #tpu.memory_space<vmem>>, vector<1x1x32xf32>
    %72 = vector.shape_cast %71 : vector<1x1x32xf32> to vector<1x32xf32>
    %c2_65 = arith.constant 2 : index
    %c0_66 = arith.constant 0 : index
    %c0_67 = arith.constant 0 : index
    %c0_68 = arith.constant 0 : index
    %73 = vector.load %arg3[%c2_65, %c0_66, %c0_67, %c0_68] : memref<3x2x32x32xbf16, #tpu.memory_space<vmem>>, vector<1x1x32x32xbf16>
    %74 = vector.shape_cast %73 : vector<1x1x32x32xbf16> to vector<32x32xbf16>
    %cst_69 = arith.constant dense<0.000000e+00> : vector<256x32xf32>
    %75 = tpu.matmul %68, %74, %cst_69 {dimension_numbers = #tpu.dot_dimension_numbers<[1], [0], [0], [1], [0, 0, 1, 1], [], []>} : vector<256x32xbf16>, vector<32x32xbf16>, vector<256x32xf32> -> vector<256x32xf32>
    %76 = vector.broadcast %70 : vector<1x32xf32> to vector<256x32xf32>
    %77 = arith.mulf %75, %76 : vector<256x32xf32>
    %78 = vector.broadcast %72 : vector<1x32xf32> to vector<256x32xf32>
    %79 = arith.addf %77, %78 : vector<256x32xf32>
    %cst_70 = arith.constant 0.000000e+00 : f32
    %80 = vector.broadcast %cst_70 : f32 to vector<256x32xf32>
    %81 = arith.maximumf %79, %80 : vector<256x32xf32>
    %82 = vector.shape_cast %81 : vector<256x32xf32> to vector<32x8x32xf32>
    %c0_71 = arith.constant 0 : index
    %c0_72 = arith.constant 0 : index
    %c0_73 = arith.constant 0 : index
    %c0_74 = arith.constant 0 : index
    %c0_75 = arith.constant 0 : index
    %83 = vector.load %arg6[%c0_71, %c0_72, %c0_73, %c0_74, %c0_75] : memref<1x32x2x8x32xf32, #tpu.memory_space<vmem>>, vector<1x32x1x8x32xf32>
    %84 = vector.shape_cast %83 : vector<1x32x1x8x32xf32> to vector<32x8x32xf32>
    %85 = vector.shape_cast %82 : vector<32x8x32xf32> to vector<1x32x1x8x32xf32>
    tpu.vector_store %arg6[%c0_71, %c0_72, %c0_73, %c0_74, %c0_75], %85 {strides = array<i32>} : memref<1x32x2x8x32xf32, #tpu.memory_space<vmem>>, vector<1x32x1x8x32xf32>,
    %c2_76 = arith.constant 2 : index
    %c1_77 = arith.constant 1 : index
    %c0_78 = arith.constant 0 : index
    %c0_79 = arith.constant 0 : index
    %86 = vector.load %arg3[%c2_76, %c1_77, %c0_78, %c0_79] : memref<3x2x32x32xbf16, #tpu.memory_space<vmem>>, vector<1x1x32x32xbf16>
    %87 = vector.shape_cast %86 : vector<1x1x32x32xbf16> to vector<32x32xbf16>
    %cst_80 = arith.constant dense<0.000000e+00> : vector<256x32xf32>
    %88 = tpu.matmul %68, %87, %cst_80 {dimension_numbers = #tpu.dot_dimension_numbers<[1], [0], [0], [1], [0, 0, 1, 1], [], []>} : vector<256x32xbf16>, vector<32x32xbf16>, vector<256x32xf32> -> vector<256x32xf32>
    %89 = vector.broadcast %70 : vector<1x32xf32> to vector<256x32xf32>
    %90 = arith.mulf %88, %89 : vector<256x32xf32>
    %91 = vector.broadcast %72 : vector<1x32xf32> to vector<256x32xf32>
    %92 = arith.addf %90, %91 : vector<256x32xf32>
    %cst_81 = arith.constant 0.000000e+00 : f32
    %93 = vector.broadcast %cst_81 : f32 to vector<256x32xf32>
    %94 = arith.maximumf %92, %93 : vector<256x32xf32>
    %95 = vector.shape_cast %94 : vector<256x32xf32> to vector<32x8x32xf32>
    %c0_82 = arith.constant 0 : index
    %c0_83 = arith.constant 0 : index
    %c1_84 = arith.constant 1 : index
    %c0_85 = arith.constant 0 : index
    %c0_86 = arith.constant 0 : index
    %96 = vector.load %arg6[%c0_82, %c0_83, %c1_84, %c0_85, %c0_86] : memref<1x32x2x8x32xf32, #tpu.memory_space<vmem>>, vector<1x32x1x8x32xf32>
    %97 = vector.shape_cast %96 : vector<1x32x1x8x32xf32> to vector<32x8x32xf32>
    %98 = vector.shape_cast %95 : vector<32x8x32xf32> to vector<1x32x1x8x32xf32>
    tpu.vector_store %arg6[%c0_82, %c0_83, %c1_84, %c0_85, %c0_86], %98 {strides = array<i32>} : memref<1x32x2x8x32xf32, #tpu.memory_space<vmem>>, vector<1x32x1x8x32xf32>,
    return
  }
  func.func @transform_0(%arg0: i32, %arg1: i32) -> (i32, i32, i32) {
    %c0_i32 = arith.constant 0 : i32
    %c0_i32_0 = arith.constant 0 : i32
    return %arg0, %arg1, %c0_i32 : i32, i32, i32
  }
  func.func @transform_1(%arg0: i32, %arg1: i32) -> (i32, i32, i32, i32) {
    %c0_i32 = arith.constant 0 : i32
    %c0_i32_0 = arith.constant 0 : i32
    %c0_i32_1 = arith.constant 0 : i32
    %c0_i32_2 = arith.constant 0 : i32
    %c0_i32_3 = arith.constant 0 : i32
    return %c0_i32, %c0_i32_0, %c0_i32_1, %c0_i32_2 : i32, i32, i32, i32
  }
  func.func @transform_2(%arg0: i32, %arg1: i32) -> (i32, i32, i32) {
    %c0_i32 = arith.constant 0 : i32
    %c0_i32_0 = arith.constant 0 : i32
    %c0_i32_1 = arith.constant 0 : i32
    %c0_i32_2 = arith.constant 0 : i32
    return %c0_i32, %c0_i32_0, %c0_i32_1 : i32, i32, i32
  }
  func.func @transform_3(%arg0: i32, %arg1: i32) -> (i32, i32, i32) {
    %c0_i32 = arith.constant 0 : i32
    %c0_i32_0 = arith.constant 0 : i32
    %c0_i32_1 = arith.constant 0 : i32
    %c0_i32_2 = arith.constant 0 : i32
    return %c0_i32, %c0_i32_0, %c0_i32_1 : i32, i32, i32
  }
  func.func @transform_4(%arg0: i32, %arg1: i32) -> (i32, i32, i32, i32, i32) {
    %c0_i32 = arith.constant 0 : i32
    %c0_i32_0 = arith.constant 0 : i32
    %c0_i32_1 = arith.constant 0 : i32
    %c0_i32_2 = arith.constant 0 : i32
    return %arg0, %arg1, %c0_i32, %c0_i32_0, %c0_i32_1 : i32, i32, i32, i32, i32
  }
}

</mosaic_0001>

<llo_original>
// kernel: uphead8x_forward.1
$region0: #{uphead8x_forward.1}
  #allocation0 [shape = 'u32[]', space=smem, size = 0x4, offset = 0x4, fixed_abs, tag = 'smem constant byte address 0x4 - core index']
  #allocation1 [shape = 'u32[72,128]{1,0:T(1,128)}', space=vmem, size = 0x9000, scoped, tag = 'internal scratch']
  #allocation2 [shape = 'f32[8,2,8,32]{3,2,1,0:T(8,128)}', space=vmem, size = 0x10000, scoped, tag = 'scratch operand']
  #allocation3 [shape = 'f32[16,2,8,32]{3,2,1,0:T(8,128)}', space=vmem, size = 0x20000, scoped, tag = 'scratch operand']
  %s0 = inlined_call_operand.hbm [shape: f32[2,64,32], index: 0, kind: input, shape index: {}]
  %s1 = inlined_call_operand.hbm [shape: bf16[3,2,32,32], index: 1, kind: input, shape index: {}]
  %s2 = inlined_call_operand.hbm [shape: f32[3,1,32], index: 2, kind: input, shape index: {}]
  %s3 = inlined_call_operand.hbm [shape: f32[3,1,32], index: 3, kind: input, shape index: {}]
  %s4 = inlined_call_operand.vmem [shape: f32[2,32,2,8,32], index: 4, kind: output, shape index: {}]
  %s5 = sld [smem:[#allocation0]]
  $region65: #{uphead8x_forward.1} parent=0
    _
  %s7 = ssub.s32 1, %s5
  %s8 = scalar_select 0, %s7, %s5
  $region1: #{uphead8x_forward.1} parent=0
    #allocation4 [shape = 'u8[65536]{0}', space=vmem, size = 0x10000, scoped, tag = 'input window, operand 0']
    #allocation5 [shape = 's32[2]{0}', space=sflag, size = 0x8, scoped, tag = 'scoped memory for uphead8x_forward.1']
    #allocation6 [shape = 'u8[49152]{0}', space=vmem, size = 0xc000, scoped, tag = 'input window, operand 1, single buffered']
    #allocation7 [shape = 's32[1]{0}', space=sflag, size = 0x4, scoped, tag = 'scoped memory for uphead8x_forward.1']
    #allocation8 [shape = 'u8[1536]{0}', space=vmem, size = 0x800, scoped, tag = 'input window, operand 2, single buffered']
    #allocation9 [shape = 'u8[1536]{0}', space=vmem, size = 0x800, scoped, tag = 'input window, operand 3, single buffered']
    #allocation10 [shape = 's32[1]{0}', space=sflag, size = 0x4, scoped, tag = 'scoped memory for uphead8x_forward.1']
    %9 = vsyncpa [#allocation5], 0
    %s10 = scalar_lea.sflag [#allocation5], 1
    %11 = vsyncpa %s10, 0
    %12 = vsyncpa [#allocation7], 0
    %13 = vsyncpa [#allocation10], 0
    loop: start=0, step=1, limit=4
    $region2: #{uphead8x_forward.1} parent=1 // loop_pre_header
      _
    $region3: #{uphead8x_forward.1} parent=1 // loop_header
      %s15 = sphi 0, %s19
      %p16 = scmp.ge.s32.totalorder %s15, 4
      %s22 = sphi 0, %s34
      %s23 = sphi 0, %s30
      %s24 = sphi 0, %s22
      %s25 = sphi 0, %s23
      %s26 = sphi 0, %s24
      %s27 = sphi 0, %s25
      %s39 = sphi 0, %s41
      %s42 = sphi 0, %s39
      %s43 = sphi 0, %s42
      %s59 = sphi 0, %s43
      %s63 = sphi 0, %s63
      %s65 = sphi 0, %s63
      %s66 = sphi 0, %s65
      %s80 = sphi 0, %s66
      %s84 = sphi 0, %s84
      %s86 = sphi 0, %s84
      %s87 = sphi 0, %s86
      %s101 = sphi 0, %s87
      %s105 = sphi 0, %s105
      %s107 = sphi 0, %s105
      %s108 = sphi 0, %s107
      %s122 = sphi 0, %s108
      %s130 = sphi 0, %s132
      %s133 = sphi 0, %s130
      %s134 = sphi 0, %s133
      %s150 = sphi 0, %s134
    $region4: #{uphead8x_forward.1} parent=1 // loop_header_branch
      %18 = sbr.rel (%p16) target = $region8
    $region5: #{uphead8x_forward.1} parent=1 // loop_body
      %s20 = ssub.s32 %s15, 1
      %s21 = ssub.s32 %s15, 2
      %s28 = sadd.s32 1, %s23
      %p29 = scmp.ge.s32.totalorder %s28, 1
      %s30 = scalar_select %p29, 0, %s28
      %s31 = sadd.s32 1, %s22
      %s32 = scalar_select %p29, %s31, %s22
      %p33 = scmp.ge.s32.totalorder %s32, 2
      %s34 = scalar_select %p33, 0, %s32
      %s35 = ssub.s32 %s22, %s34
      %s36 = ssub.s32 %s23, %s30
      %s37 = sor.u32 %s35, %s36
      %p38 = scmp.eq.s32.totalorder %s37, 0
      %s40 = sadd.s32 %s39, 1
      %s41 = scalar_select %p38, %s39, %s40
      %p44 = pneg %p38
      %p45 = scmp.eq.s32.totalorder %s15, 1
      %p46 = por %p44, %p45
      %p47 = scmp.ne.s32.totalorder %s39, %s42
      %p48 = scmp.eq.s32.totalorder %s15, 0
      %p49 = por %p47, %p48
      %p50 = scmp.ne.s32.totalorder %s39, %s42
      %p51 = scmp.eq.s32.totalorder %s20, 1
      %p52 = por %p50, %p51
      %p53 = scmp.ne.s32.totalorder %s42, %s43
      %p54 = scmp.eq.s32.totalorder %s20, 0
      %p55 = por %p53, %p54
      %p56 = scmp.ne.s32.totalorder %s42, %s43
      %p57 = scmp.eq.s32.totalorder %s21, 1
      %p58 = por %p56, %p57
      %p60 = scmp.ne.s32.totalorder %s43, %s59
      %p61 = scmp.eq.s32.totalorder %s21, 0
      %p62 = por %p60, %p61
      %s64 = sadd.s32 %s63, 1
      %p67 = scmp.eq.s32.totalorder %s15, 1
      %p68 = scmp.ne.s32.totalorder %s63, %s65
      %p69 = scmp.eq.s32.totalorder %s15, 0
      %p70 = por %p68, %p69
      %p71 = scmp.ne.s32.totalorder %s63, %s65
      %p72 = scmp.eq.s32.totalorder %s20, 1
      %p73 = por %p71, %p72
      %p74 = scmp.ne.s32.totalorder %s65, %s66
      %p75 = scmp.eq.s32.totalorder %s20, 0
      %p76 = por %p74, %p75
      %p77 = scmp.ne.s32.totalorder %s65, %s66
      %p78 = scmp.eq.s32.totalorder %s21, 1
      %p79 = por %p77, %p78
      %p81 = scmp.ne.s32.totalorder %s66, %s80
      %p82 = scmp.eq.s32.totalorder %s21, 0
      %p83 = por %p81, %p82
      %s85 = sadd.s32 %s84, 1
      %p88 = scmp.eq.s32.totalorder %s15, 1
      %p89 = scmp.ne.s32.totalorder %s84, %s86
      %p90 = scmp.eq.s32.totalorder %s15, 0
      %p91 = por %p89, %p90
      %p92 = scmp.ne.s32.totalorder %s84, %s86
      %p93 = scmp.eq.s32.totalorder %s20, 1
      %p94 = por %p92, %p93
      %p95 = scmp.ne.s32.totalorder %s86, %s87
      %p96 = scmp.eq.s32.totalorder %s20, 0
      %p97 = por %p95, %p96
      %p98 = scmp.ne.s32.totalorder %s86, %s87
      %p99 = scmp.eq.s32.totalorder %s21, 1
      %p100 = por %p98, %p99
      %p102 = scmp.ne.s32.totalorder %s87, %s101
      %p103 = scmp.eq.s32.totalorder %s21, 0
      %p104 = por %p102, %p103
      %s106 = sadd.s32 %s105, 1
      %p109 = scmp.eq.s32.totalorder %s15, 1
      %p110 = scmp.ne.s32.totalorder %s105, %s107
      %p111 = scmp.eq.s32.totalorder %s15, 0
      %p112 = por %p110, %p111
      %p113 = scmp.ne.s32.totalorder %s105, %s107
      %p114 = scmp.eq.s32.totalorder %s20, 1
      %p115 = por %p113, %p114
      %p116 = scmp.ne.s32.totalorder %s107, %s108
      %p117 = scmp.eq.s32.totalorder %s20, 0
      %p118 = por %p116, %p117
      %p119 = scmp.ne.s32.totalorder %s107, %s108
      %p120 = scmp.eq.s32.totalorder %s21, 1
      %p121 = por %p119, %p120
      %p123 = scmp.ne.s32.totalorder %s108, %s122
      %p124 = scmp.eq.s32.totalorder %s21, 0
      %p125 = por %p123, %p124
      %s126 = ssub.s32 %s22, %s34
      %s127 = ssub.s32 %s23, %s30
      %s128 = sor.u32 %s126, %s127
      %p129 = scmp.eq.s32.totalorder %s128, 0
      %s131 = sadd.s32 %s130, 1
      %s132 = scalar_select %p129, %s130, %s131
      %p135 = pneg %p129
      %p136 = scmp.eq.s32.totalorder %s15, 1
      %p137 = por %p135, %p136
      %p138 = scmp.ne.s32.totalorder %s130, %s133
      %p139 = scmp.eq.s32.totalorder %s15, 0
      %p140 = por %p138, %p139
      %p141 = scmp.ne.s32.totalorder %s130, %s133
      %p142 = scmp.eq.s32.totalorder %s20, 1
      %p143 = por %p141, %p142
      %p144 = scmp.ne.s32.totalorder %s133, %s134
      %p145 = scmp.eq.s32.totalorder %s20, 0
      %p146 = por %p144, %p145
      %p147 = scmp.ne.s32.totalorder %s133, %s134
      %p148 = scmp.eq.s32.totalorder %s21, 1
      %p149 = por %p147, %p148
      %p151 = scmp.ne.s32.totalorder %s134, %s150
      %p152 = scmp.eq.s32.totalorder %s21, 0
      %p153 = por %p151, %p152
      %p154 = scmp.le.s32.totalorder 1, %s15
      %p155 = scmp.lt.s32.totalorder %s15, 3
      %p156 = pnand %p154, %p155
      %p157 = pneg %p156
      // Predicated region
      $region9: #{uphead8x_forward.1} parent=5 // pred_check
        _
      $region10: #{uphead8x_forward.1} parent=5 // pred_check_branch
        %159 = sbr.rel (%p156) target = $region12
      $region11: #{uphead8x_forward.1} parent=5 // pred_region
        %s160 = ssub.s32 %s15, 1
        // Predicated region
        $region13: #{uphead8x_forward.1} parent=11 // pred_check
          %p161 = pneg %p76
        $region14: #{uphead8x_forward.1} parent=11 // pred_check_branch
          %163 = sbr.rel (%p161) target = $region16
        $region15: #{uphead8x_forward.1} parent=11 // pred_region
          %165 = vsyncadd [#allocation7], 0
          %s166 = sshll.u32 %s1, 4
          %s167 = int_to_ptr.hbm [resolvable:$true] %s166
          %s168 = sshll.u32 [#allocation6], 4
          %s169 = int_to_ptr.vmem [resolvable:$true] %s168
          %174 = dma.hbm_to_vmem [thread:$0]  %s167, 1536, %s169, [#allocation7], 64, 64, 4
        $region16: #{uphead8x_forward.1} parent=11 // pred_fallthru
          _
        // Predicated region
        $region17: #{uphead8x_forward.1} parent=11 // pred_check
          %p175 = pneg %p97
        $region18: #{uphead8x_forward.1} parent=11 // pred_check_branch
          %177 = sbr.rel (%p175) target = $region20
        $region19: #{uphead8x_forward.1} parent=11 // pred_region
          %179 = vsyncadd [#allocation7], 0
          %s180 = sshll.u32 %s2, 4
          %s181 = int_to_ptr.hbm [resolvable:$true] %s180
          %s182 = sshll.u32 [#allocation8], 4
          %s183 = int_to_ptr.vmem [resolvable:$true] %s182
          %188 = dma.hbm_to_vmem [thread:$0]  %s181, 48, %s183, [#allocation7], 16, 16, 1
        $region20: #{uphead8x_forward.1} parent=11 // pred_fallthru
          _
        // Predicated region
        $region21: #{uphead8x_forward.1} parent=11 // pred_check
          %p189 = pneg %p118
        $region22: #{uphead8x_forward.1} parent=11 // pred_check_branch
          %191 = sbr.rel (%p189) target = $region24
        $region23: #{uphead8x_forward.1} parent=11 // pred_region
          %193 = vsyncadd [#allocation10], 0
          %s194 = sshll.u32 %s3, 4
          %s195 = int_to_ptr.hbm [resolvable:$true] %s194
          %s196 = sshll.u32 [#allocation9], 4
          %s197 = int_to_ptr.vmem [resolvable:$true] %s196
          %202 = dma.hbm_to_vmem [thread:$0]  %s195, 48, %s197, [#allocation10], 16, 16, 1
        $region24: #{uphead8x_forward.1} parent=11 // pred_fallthru
          _
      $region12: #{uphead8x_forward.1} parent=5 // pred_fallthru
        _
      %p203 = scmp.lt.s32.totalorder %s15, 2
      // Predicated region
      $region25: #{uphead8x_forward.1} parent=5 // pred_check
        %p204 = pneg %p203
      $region26: #{uphead8x_forward.1} parent=5 // pred_check_branch
        %206 = sbr.rel (%p204) target = $region28
      $region27: #{uphead8x_forward.1} parent=5 // pred_region
        // Predicated region
        $region29: #{uphead8x_forward.1} parent=27 // pred_check
          %p207 = pneg %p49
        $region30: #{uphead8x_forward.1} parent=27 // pred_check_branch
          %209 = sbr.rel (%p207) target = $region32
        $region31: #{uphead8x_forward.1} parent=27 // pred_region
          %s210 = sand.u32 %s39, 1
          %s211 = scalar_lea.sflag [#allocation5], %s210
          %s212 = sand.u32 %s39, 1
          %s213 = smul.addr %s212, 64
          %s214 = scalar_lea.vmem [#allocation4], %s213
          %s215 = smul.u32 8, %s23
          %217 = vsyncadd %s211, 0
          %s218 = smul.addr %s22, 8
          %s219 = sadd.s32 %s215, %s218
          %s220 = smul.addr %s219, 8
          %s221 = scalar_lea.hbm %s0, %s220
          %s222 = sshll.u32 %s221, 4
          %s223 = int_to_ptr.hbm [resolvable:$true] %s222
          %s224 = sshll.u32 %s214, 4
          %s225 = int_to_ptr.vmem [resolvable:$true] %s224
          %230 = dma.hbm_to_vmem [thread:$0]  %s223, 1024, %s225, %s211, 128, 128, 8
        $region32: #{uphead8x_forward.1} parent=27 // pred_fallthru
          _
      $region28: #{uphead8x_forward.1} parent=5 // pred_fallthru
        _
      %p231 = scmp.le.s32.totalorder 1, %s15
      %p232 = scmp.lt.s32.totalorder %s15, 3
      %p233 = pnand %p231, %p232
      %p234 = pneg %p233
      // Predicated region
      $region33: #{uphead8x_forward.1} parent=5 // pred_check
        _
      $region34: #{uphead8x_forward.1} parent=5 // pred_check_branch
        %236 = sbr.rel (%p233) target = $region36
      $region35: #{uphead8x_forward.1} parent=5 // pred_region
        %s237 = ssub.s32 %s15, 1
        %s238 = sand.u32 %s42, 1
        %s239 = scalar_lea.sflag [#allocation5], %s238
        %s240 = sand.u32 %s42, 1
        %s241 = smul.addr %s240, 64
        %s242 = scalar_lea.vmem [#allocation4], %s241
        // Predicated region
        $region37: #{uphead8x_forward.1} parent=35 // pred_check
          %p243 = pneg %p55
        $region38: #{uphead8x_forward.1} parent=35 // pred_check_branch
          %245 = sbr.rel (%p243) target = $region40
        $region39: #{uphead8x_forward.1} parent=35 // pred_region
          %247 = dma.done %s239, 1024
        $region40: #{uphead8x_forward.1} parent=35 // pred_fallthru
          _
        // Predicated region
        $region41: #{uphead8x_forward.1} parent=35 // pred_check
          %p248 = pneg %p76
        $region42: #{uphead8x_forward.1} parent=35 // pred_check_branch
          %250 = sbr.rel (%p248) target = $region44
        $region43: #{uphead8x_forward.1} parent=35 // pred_region
          %252 = dma.done [#allocation7], 1536
        $region44: #{uphead8x_forward.1} parent=35 // pred_fallthru
          _
        // Predicated region
        $region45: #{uphead8x_forward.1} parent=35 // pred_check
          %p253 = pneg %p97
        $region46: #{uphead8x_forward.1} parent=35 // pred_check_branch
          %255 = sbr.rel (%p253) target = $region48
        $region47: #{uphead8x_forward.1} parent=35 // pred_region
          %257 = dma.done [#allocation7], 48
        $region48: #{uphead8x_forward.1} parent=35 // pred_fallthru
          _
        // Predicated region
        $region49: #{uphead8x_forward.1} parent=35 // pred_check
          %p258 = pneg %p118
        $region50: #{uphead8x_forward.1} parent=35 // pred_check_branch
          %260 = sbr.rel (%p258) target = $region52
        $region51: #{uphead8x_forward.1} parent=35 // pred_region
          %262 = dma.done [#allocation10], 48
        $region52: #{uphead8x_forward.1} parent=35 // pred_fallthru
          _
        %s263 = sand.u32 %s42, 1
        %s264 = scalar_lea.sflag [#allocation5], %s263
        %s265 = sand.u32 %s42, 1
        %s266 = smul.addr %s265, 64
        %s267 = scalar_lea.vmem [#allocation4], %s266
        %p268 = pneg %p55
        %p269 = pneg %p52
        %p270 = pneg %p76
        %p271 = pneg %p73
        %p272 = pneg %p97
        %p273 = pneg %p94
        %p274 = pneg %p118
        %p275 = pneg %p115
        %p276 = pneg %p146
        %p277 = pneg %p143
        %s278 = smul.u32 32, %s25
        %p279 = scmp.lt.s32.totalorder %s24, 1
        %s280 = scalar_select %p279, %s24, 1
        %p281 = scmp.lt.s32.totalorder %s278, 31
        %s282 = scalar_select %p281, %s278, 31
        %s283 = smul.addr %s282, 2
        %s284 = smul.addr %s280, 64
        %s285 = sadd.s32 %s283, %s284
        %s286 = smul.addr %s285, 8
        %s287 = scalar_lea.vmem %s4, %s286
        %s288 = smul.u32 8, %s25
        %s289 = smul.u32 32, %s25
        %p290 = scmp.lt.s32.totalorder %s24, 1
        %s291 = scalar_select %p290, %s24, 1
        %p292 = scmp.lt.s32.totalorder %s289, 31
        %s293 = scalar_select %p292, %s289, 31
        %s294 = smul.addr %s293, 2
        %s295 = smul.addr %s291, 64
        %s296 = sadd.s32 %s294, %s295
        %s297 = smul.addr %s296, 8
        %s298 = scalar_lea.vmem %s4, %s297
        %s299 = smul.u32 32, %s25
        %v301 = vld [vmem:[%s242] sm:$0xff]
        %v302 = vld [vmem:[%s242 + $0x8] sm:$0xff]
        %v303 = vld [vmem:[%s242 + $0x10] sm:$0xff]
        %v304 = vld [vmem:[%s242 + $0x18] sm:$0xff]
        %v305 = vld [vmem:[%s242 + $0x20] sm:$0xff]
        %v306 = vld [vmem:[%s242 + $0x28] sm:$0xff]
        %v307 = vld [vmem:[%s242 + $0x30] sm:$0xff]
        %v308 = vld [vmem:[%s242 + $0x38] sm:$0xff]
        %v309 = vpack.c.bf16 %v302, %v301
        %v310 = vpack.c.bf16 %v304, %v303
        %v311 = vpack.c.bf16 %v306, %v305
        %v312 = vpack.c.bf16 %v308, %v307
        %v313 = vld [vmem:[#allocation8] sm:$0x1]
        %v314 = vld [vmem:[#allocation9] sm:$0x1]
        %v315 = vld [vmem:[#allocation6] sm:$0xf]
        %v316 = vld [vmem:[#allocation6 + $0x4] sm:$0xf]
        %v317 = vld [vmem:[#allocation6 + $0x8] sm:$0xf]
        %v318 = vld [vmem:[#allocation6 + $0xc] sm:$0xf]
        %v323 = vunpack.c.l.b16 %v315
        %v324 = vunpack.c.l.b16 %v316
        %v325 = vunpack.c.l.b16 %v317
        %v326 = vunpack.c.l.b16 %v318
        %v327 = vpack.c.b16 %v324, %v323
        %v328 = vpack.c.b16 %v326, %v325
        %vm331 = vcmask 261120
        %v333 = vsel %vm331, %v309, 0
        %v336 = vsel %vm331, %v310, 0
        %v339 = vsel %vm331, %v311, 0
        %v342 = vsel %vm331, %v312, 0
        %344 = vmatpush.bf16.msra.mxu0 0
        %345 = vmatpush.bf16.msra.mxu0 0
        %346 = vmatpush.bf16.msra.mxu0 0
        %347 = vmatpush.bf16.msra.mxu0 0
        %348 = vmatpush.bf16.msra.mxu0 0
        %349 = vmatpush.bf16.msra.mxu0 0
        %350 = vmatpush.bf16.msra.mxu0 %v328
        %351 = vmatpush.bf16.msra.mxu0 %v327
        %352 = vmatmul.bf16.gmra.mxu0 %v333
        %v353 = vpop.f32.mrf.mxu0
        %v354 = vadd.f32 0.0, %v353
        %v355 = vpop.f32.mrf.mxu0
        %v356 = vadd.f32 0.0, %v355
        %357 = vmatmul.bf16.gmra.mxu0 %v336
        %v358 = vpop.f32.mrf.mxu0
        %v359 = vadd.f32 0.0, %v358
        %v360 = vpop.f32.mrf.mxu0
        %v361 = vadd.f32 0.0, %v360
        %362 = vmatmul.bf16.gmra.mxu0 %v339
        %v363 = vpop.f32.mrf.mxu0
        %v364 = vadd.f32 0.0, %v363
        %v365 = vpop.f32.mrf.mxu0
        %v366 = vadd.f32 0.0, %v365
        %367 = vmatmul.bf16.gmra.mxu0 %v342
        %v368 = vpop.f32.mrf.mxu0
        %v369 = vadd.f32 0.0, %v368
        %v370 = vpop.f32.mrf.mxu0
        %v371 = vadd.f32 0.0, %v370
        %372 = vdwg.mxu0
        %v374 = vperm.slane %v313, 0
        %v376 = vmul.f32 %v354, %v374
        %v377 = vmul.f32 %v356, %v374
        %v378 = vmul.f32 %v359, %v374
        %v379 = vmul.f32 %v361, %v374
        %v380 = vmul.f32 %v364, %v374
        %v381 = vmul.f32 %v366, %v374
        %v382 = vmul.f32 %v369, %v374
        %v383 = vmul.f32 %v371, %v374
        %v385 = vperm.slane %v314, 0
        %v387 = vadd.f32 %v376, %v385
        %v388 = vadd.f32 %v377, %v385
        %v389 = vadd.f32 %v378, %v385
        %v390 = vadd.f32 %v379, %v385
        %v391 = vadd.f32 %v380, %v385
        %v392 = vadd.f32 %v381, %v385
        %v393 = vadd.f32 %v382, %v385
        %v394 = vadd.f32 %v383, %v385
        %v395 = vmax.f32 %v387, 0.0
        %v396 = vmax.f32 %v388, 0.0
        %v397 = vmax.f32 %v389, 0.0
        %v398 = vmax.f32 %v390, 0.0
        %v399 = vmax.f32 %v391, 0.0
        %v400 = vmax.f32 %v392, 0.0
        %v401 = vmax.f32 %v393, 0.0
        %v402 = vmax.f32 %v394, 0.0
        %403 = vst.msk [vmem:[#allocation2] sm:$0xff] %vm331, %v395
        %404 = vst.msk [vmem:[#allocation2 + $0x10] sm:$0xff] %vm331, %v396
        %405 = vst.msk [vmem:[#allocation2 + $0x20] sm:$0xff] %vm331, %v397
        %406 = vst.msk [vmem:[#allocation2 + $0x30] sm:$0xff] %vm331, %v398
        %407 = vst.msk [vmem:[#allocation2 + $0x40] sm:$0xff] %vm331, %v399
        %408 = vst.msk [vmem:[#allocation2 + $0x50] sm:$0xff] %vm331, %v400
        %409 = vst.msk [vmem:[#allocation2 + $0x60] sm:$0xff] %vm331, %v401
        %410 = vst.msk [vmem:[#allocation2 + $0x70] sm:$0xff] %vm331, %v402
        %s411 = scalar_lea.vmem [#allocation6], 16
        %v412 = vld [vmem:[%s411] sm:$0xf]
        %v413 = vld [vmem:[%s411 + $0x4] sm:$0xf]
        %v414 = vld [vmem:[%s411 + $0x8] sm:$0xf]
        %v415 = vld [vmem:[%s411 + $0xc] sm:$0xf]
        %v420 = vunpack.c.l.b16 %v412
        %v421 = vunpack.c.l.b16 %v413
        %v422 = vunpack.c.l.b16 %v414
        %v423 = vunpack.c.l.b16 %v415
        %v424 = vpack.c.b16 %v421, %v420
        %v425 = vpack.c.b16 %v423, %v422
        %428 = vmatpush.bf16.msra.mxu0 0
        %429 = vmatpush.bf16.msra.mxu0 0
        %430 = vmatpush.bf16.msra.mxu0 0
        %431 = vmatpush.bf16.msra.mxu0 0
        %432 = vmatpush.bf16.msra.mxu0 0
        %433 = vmatpush.bf16.msra.mxu0 0
        %434 = vmatpush.bf16.msra.mxu0 %v425
        %435 = vmatpush.bf16.msra.mxu0 %v424
        %436 = vmatmul.bf16.gmra.mxu0 %v333
        %v437 = vpop.f32.mrf.mxu0
        %v438 = vadd.f32 0.0, %v437
        %v439 = vpop.f32.mrf.mxu0
        %v440 = vadd.f32 0.0, %v439
        %441 = vmatmul.bf16.gmra.mxu0 %v336
        %v442 = vpop.f32.mrf.mxu0
        %v443 = vadd.f32 0.0, %v442
        %v444 = vpop.f32.mrf.mxu0
        %v445 = vadd.f32 0.0, %v444
        %446 = vmatmul.bf16.gmra.mxu0 %v339
        %v447 = vpop.f32.mrf.mxu0
        %v448 = vadd.f32 0.0, %v447
        %v449 = vpop.f32.mrf.mxu0
        %v450 = vadd.f32 0.0, %v449
        %451 = vmatmul.bf16.gmra.mxu0 %v342
        %v452 = vpop.f32.mrf.mxu0
        %v453 = vadd.f32 0.0, %v452
        %v454 = vpop.f32.mrf.mxu0
        %v455 = vadd.f32 0.0, %v454
        %456 = vdwg.mxu0
        %v457 = vmul.f32 %v438, %v374
        %v458 = vmul.f32 %v440, %v374
        %v459 = vmul.f32 %v443, %v374
        %v460 = vmul.f32 %v445, %v374
        %v461 = vmul.f32 %v448, %v374
        %v462 = vmul.f32 %v450, %v374
        %v463 = vmul.f32 %v453, %v374
        %v464 = vmul.f32 %v455, %v374
        %v465 = vadd.f32 %v457, %v385
        %v466 = vadd.f32 %v458, %v385
        %v467 = vadd.f32 %v459, %v385
        %v468 = vadd.f32 %v460, %v385
        %v469 = vadd.f32 %v461, %v385
        %v470 = vadd.f32 %v462, %v385
        %v471 = vadd.f32 %v463, %v385
        %v472 = vadd.f32 %v464, %v385
        %v473 = vmax.f32 %v465, 0.0
        %v474 = vmax.f32 %v466, 0.0
        %v475 = vmax.f32 %v467, 0.0
        %v476 = vmax.f32 %v468, 0.0
        %v477 = vmax.f32 %v469, 0.0
        %v478 = vmax.f32 %v470, 0.0
        %v479 = vmax.f32 %v471, 0.0
        %v480 = vmax.f32 %v472, 0.0
        %s481 = scalar_lea.vmem [#allocation2], 8
        %482 = vst.msk [vmem:[%s481] sm:$0xff] %vm331, %v473
        %483 = vst.msk [vmem:[%s481 + $0x10] sm:$0xff] %vm331, %v474
        %484 = vst.msk [vmem:[%s481 + $0x20] sm:$0xff] %vm331, %v475
        %485 = vst.msk [vmem:[%s481 + $0x30] sm:$0xff] %vm331, %v476
        %486 = vst.msk [vmem:[%s481 + $0x40] sm:$0xff] %vm331, %v477
        %487 = vst.msk [vmem:[%s481 + $0x50] sm:$0xff] %vm331, %v478
        %488 = vst.msk [vmem:[%s481 + $0x60] sm:$0xff] %vm331, %v479
        %489 = vst.msk [vmem:[%s481 + $0x70] sm:$0xff] %vm331, %v480
        %v490 = vld [vmem:[#allocation2] sm:$0xff]
        %v491 = vld [vmem:[#allocation2 + $0x8] sm:$0xff]
        %v492 = vld [vmem:[#allocation2 + $0x10] sm:$0xff]
        %v493 = vld [vmem:[#allocation2 + $0x18] sm:$0xff]
        %v494 = vld [vmem:[#allocation2 + $0x20] sm:$0xff]
        %v495 = vld [vmem:[#allocation2 + $0x28] sm:$0xff]
        %v496 = vld [vmem:[#allocation2 + $0x30] sm:$0xff]
        %v497 = vld [vmem:[#allocation2 + $0x38] sm:$0xff]
        %v498 = vld [vmem:[#allocation2 + $0x40] sm:$0xff]
        %v499 = vld [vmem:[#allocation2 + $0x48] sm:$0xff]
        %v500 = vld [vmem:[#allocation2 + $0x50] sm:$0xff]
        %v501 = vld [vmem:[#allocation2 + $0x58] sm:$0xff]
        %v502 = vld [vmem:[#allocation2 + $0x60] sm:$0xff]
        %v503 = vld [vmem:[#allocation2 + $0x68] sm:$0xff]
        %v504 = vld [vmem:[#allocation2 + $0x70] sm:$0xff]
        %v505 = vld [vmem:[#allocation2 + $0x78] sm:$0xff]
        %v506 = vpack.c.bf16 %v491, %v490
        %v507 = vpack.c.bf16 %v493, %v492
        %v508 = vpack.c.bf16 %v495, %v494
        %v509 = vpack.c.bf16 %v497, %v496
        %v510 = vpack.c.bf16 %v499, %v498
        %v511 = vpack.c.bf16 %v501, %v500
        %v512 = vpack.c.bf16 %v503, %v502
        %v513 = vpack.c.bf16 %v505, %v504
        %s514 = scalar_lea.vmem [#allocation8], 1
        %v515 = vld [vmem:[%s514] sm:$0x1]
        %s516 = scalar_lea.vmem [#allocation9], 1
        %v517 = vld [vmem:[%s516] sm:$0x1]
        %s518 = scalar_lea.vmem [#allocation6], 32
        %v519 = vld [vmem:[%s518] sm:$0xf]
        %v520 = vld [vmem:[%s518 + $0x4] sm:$0xf]
        %v521 = vld [vmem:[%s518 + $0x8] sm:$0xf]
        %v522 = vld [vmem:[%s518 + $0xc] sm:$0xf]
        %v527 = vunpack.c.l.b16 %v519
        %v528 = vunpack.c.l.b16 %v520
        %v529 = vunpack.c.l.b16 %v521
        %v530 = vunpack.c.l.b16 %v522
        %v531 = vpack.c.b16 %v528, %v527
        %v532 = vpack.c.b16 %v530, %v529
        %v536 = vsel %vm331, %v506, 0
        %v539 = vsel %vm331, %v507, 0
        %v542 = vsel %vm331, %v508, 0
        %v545 = vsel %vm331, %v509, 0
        %v548 = vsel %vm331, %v510, 0
        %v551 = vsel %vm331, %v511, 0
        %v554 = vsel %vm331, %v512, 0
        %v557 = vsel %vm331, %v513, 0
        %559 = vmatpush.bf16.msra.mxu0 0
        %560 = vmatpush.bf16.msra.mxu0 0
        %561 = vmatpush.bf16.msra.mxu0 0
        %562 = vmatpush.bf16.msra.mxu0 0
        %563 = vmatpush.bf16.msra.mxu0 0
        %564 = vmatpush.bf16.msra.mxu0 0
        %565 = vmatpush.bf16.msra.mxu0 %v532
        %566 = vmatpush.bf16.msra.mxu0 %v531
        %567 = vmatmul.bf16.gmra.mxu0 %v536
        %v568 = vpop.f32.mrf.mxu0
        %v569 = vadd.f32 0.0, %v568
        %v570 = vpop.f32.mrf.mxu0
        %v571 = vadd.f32 0.0, %v570
        %572 = vmatmul.bf16.gmra.mxu0 %v539
        %v573 = vpop.f32.mrf.mxu0
        %v574 = vadd.f32 0.0, %v573
        %v575 = vpop.f32.mrf.mxu0
        %v576 = vadd.f32 0.0, %v575
        %577 = vmatmul.bf16.gmra.mxu0 %v542
        %v578 = vpop.f32.mrf.mxu0
        %v579 = vadd.f32 0.0, %v578
        %v580 = vpop.f32.mrf.mxu0
        %v581 = vadd.f32 0.0, %v580
        %582 = vmatmul.bf16.gmra.mxu0 %v545
        %v583 = vpop.f32.mrf.mxu0
        %v584 = vadd.f32 0.0, %v583
        %v585 = vpop.f32.mrf.mxu0
        %v586 = vadd.f32 0.0, %v585
        %587 = vmatmul.bf16.gmra.mxu0 %v548
        %v588 = vpop.f32.mrf.mxu0
        %v589 = vadd.f32 0.0, %v588
        %v590 = vpop.f32.mrf.mxu0
        %v591 = vadd.f32 0.0, %v590
        %592 = vmatmul.bf16.gmra.mxu0 %v551
        %v593 = vpop.f32.mrf.mxu0
        %v594 = vadd.f32 0.0, %v593
        %v595 = vpop.f32.mrf.mxu0
        %v596 = vadd.f32 0.0, %v595
        %597 = vmatmul.bf16.gmra.mxu0 %v554
        %v598 = vpop.f32.mrf.mxu0
        %v599 = vadd.f32 0.0, %v598
        %v600 = vpop.f32.mrf.mxu0
        %v601 = vadd.f32 0.0, %v600
        %602 = vmatmul.bf16.gmra.mxu0 %v557
        %v603 = vpop.f32.mrf.mxu0
        %v604 = vadd.f32 0.0, %v603
        %v605 = vpop.f32.mrf.mxu0
        %v606 = vadd.f32 0.0, %v605
        %607 = vdwg.mxu0
        %v609 = vperm.slane %v515, 0
        %v611 = vmul.f32 %v569, %v609
        %v612 = vmul.f32 %v571, %v609
        %v613 = vmul.f32 %v574, %v609
        %v614 = vmul.f32 %v576, %v609
        %v615 = vmul.f32 %v579, %v609
        %v616 = vmul.f32 %v581, %v609
        %v617 = vmul.f32 %v584, %v609
        %v618 = vmul.f32 %v586, %v609
        %v619 = vmul.f32 %v589, %v609
        %v620 = vmul.f32 %v591, %v609
        %v621 = vmul.f32 %v594, %v609
        %v622 = vmul.f32 %v596, %v609
        %v623 = vmul.f32 %v599, %v609
        %v624 = vmul.f32 %v601, %v609
        %v625 = vmul.f32 %v604, %v609
        %v626 = vmul.f32 %v606, %v609
        %v628 = vperm.slane %v517, 0
        %v630 = vadd.f32 %v611, %v628
        %v631 = vadd.f32 %v612, %v628
        %v632 = vadd.f32 %v613, %v628
        %v633 = vadd.f32 %v614, %v628
        %v634 = vadd.f32 %v615, %v628
        %v635 = vadd.f32 %v616, %v628
        %v636 = vadd.f32 %v617, %v628
        %v637 = vadd.f32 %v618, %v628
        %v638 = vadd.f32 %v619, %v628
        %v639 = vadd.f32 %v620, %v628
        %v640 = vadd.f32 %v621, %v628
        %v641 = vadd.f32 %v622, %v628
        %v642 = vadd.f32 %v623, %v628
        %v643 = vadd.f32 %v624, %v628
        %v644 = vadd.f32 %v625, %v628
        %v645 = vadd.f32 %v626, %v628
        %v646 = vmax.f32 %v630, 0.0
        %v647 = vmax.f32 %v631, 0.0
        %v648 = vmax.f32 %v632, 0.0
        %v649 = vmax.f32 %v633, 0.0
        %v650 = vmax.f32 %v634, 0.0
        %v651 = vmax.f32 %v635, 0.0
        %v652 = vmax.f32 %v636, 0.0
        %v653 = vmax.f32 %v637, 0.0
        %v654 = vmax.f32 %v638, 0.0
        %v655 = vmax.f32 %v639, 0.0
        %v656 = vmax.f32 %v640, 0.0
        %v657 = vmax.f32 %v641, 0.0
        %v658 = vmax.f32 %v642, 0.0
        %v659 = vmax.f32 %v643, 0.0
        %v660 = vmax.f32 %v644, 0.0
        %v661 = vmax.f32 %v645, 0.0
        %662 = vst.msk [vmem:[#allocation3] sm:$0xff] %vm331, %v646
        %663 = vst.msk [vmem:[#allocation3 + $0x10] sm:$0xff] %vm331, %v647
        %664 = vst.msk [vmem:[#allocation3 + $0x20] sm:$0xff] %vm331, %v648
        %665 = vst.msk [vmem:[#allocation3 + $0x30] sm:$0xff] %vm331, %v649
        %666 = vst.msk [vmem:[#allocation3 + $0x40] sm:$0xff] %vm331, %v650
        %667 = vst.msk [vmem:[#allocation3 + $0x50] sm:$0xff] %vm331, %v651
        %668 = vst.msk [vmem:[#allocation3 + $0x60] sm:$0xff] %vm331, %v652
        %669 = vst.msk [vmem:[#allocation3 + $0x70] sm:$0xff] %vm331, %v653
        %670 = vst.msk [vmem:[#allocation3 + $0x80] sm:$0xff] %vm331, %v654
        %671 = vst.msk [vmem:[#allocation3 + $0x90] sm:$0xff] %vm331, %v655
        %672 = vst.msk [vmem:[#allocation3 + $0xa0] sm:$0xff] %vm331, %v656
        %673 = vst.msk [vmem:[#allocation3 + $0xb0] sm:$0xff] %vm331, %v657
        %674 = vst.msk [vmem:[#allocation3 + $0xc0] sm:$0xff] %vm331, %v658
        %675 = vst.msk [vmem:[#allocation3 + $0xd0] sm:$0xff] %vm331, %v659
        %676 = vst.msk [vmem:[#allocation3 + $0xe0] sm:$0xff] %vm331, %v660
        %677 = vst.msk [vmem:[#allocation3 + $0xf0] sm:$0xff] %vm331, %v661
        %s678 = scalar_lea.vmem [#allocation6], 48
        %v679 = vld [vmem:[%s678] sm:$0xf]
        %v680 = vld [vmem:[%s678 + $0x4] sm:$0xf]
        %v681 = vld [vmem:[%s678 + $0x8] sm:$0xf]
        %v682 = vld [vmem:[%s678 + $0xc] sm:$0xf]
        %v687 = vunpack.c.l.b16 %v679
        %v688 = vunpack.c.l.b16 %v680
        %v689 = vunpack.c.l.b16 %v681
        %v690 = vunpack.c.l.b16 %v682
        %v691 = vpack.c.b16 %v688, %v687
        %v692 = vpack.c.b16 %v690, %v689
        %695 = vmatpush.bf16.msra.mxu0 0
        %696 = vmatpush.bf16.msra.mxu0 0
        %697 = vmatpush.bf16.msra.mxu0 0
        %698 = vmatpush.bf16.msra.mxu0 0
        %699 = vmatpush.bf16.msra.mxu0 0
        %700 = vmatpush.bf16.msra.mxu0 0
        %701 = vmatpush.bf16.msra.mxu0 %v692
        %702 = vmatpush.bf16.msra.mxu0 %v691
        %703 = vmatmul.bf16.gmra.mxu0 %v536
        %v704 = vpop.f32.mrf.mxu0
        %v705 = vadd.f32 0.0, %v704
        %v706 = vpop.f32.mrf.mxu0
        %v707 = vadd.f32 0.0, %v706
        %708 = vmatmul.bf16.gmra.mxu0 %v539
        %v709 = vpop.f32.mrf.mxu0
        %v710 = vadd.f32 0.0, %v709
        %v711 = vpop.f32.mrf.mxu0
        %v712 = vadd.f32 0.0, %v711
        %713 = vmatmul.bf16.gmra.mxu0 %v542
        %v714 = vpop.f32.mrf.mxu0
        %v715 = vadd.f32 0.0, %v714
        %v716 = vpop.f32.mrf.mxu0
        %v717 = vadd.f32 0.0, %v716
        %718 = vmatmul.bf16.gmra.mxu0 %v545
        %v719 = vpop.f32.mrf.mxu0
        %v720 = vadd.f32 0.0, %v719
        %v721 = vpop.f32.mrf.mxu0
        %v722 = vadd.f32 0.0, %v721
        %723 = vmatmul.bf16.gmra.mxu0 %v548
        %v724 = vpop.f32.mrf.mxu0
        %v725 = vadd.f32 0.0, %v724
        %v726 = vpop.f32.mrf.mxu0
        %v727 = vadd.f32 0.0, %v726
        %728 = vmatmul.bf16.gmra.mxu0 %v551
        %v729 = vpop.f32.mrf.mxu0
        %v730 = vadd.f32 0.0, %v729
        %v731 = vpop.f32.mrf.mxu0
        %v732 = vadd.f32 0.0, %v731
        %733 = vmatmul.bf16.gmra.mxu0 %v554
        %v734 = vpop.f32.mrf.mxu0
        %v735 = vadd.f32 0.0, %v734
        %v736 = vpop.f32.mrf.mxu0
        %v737 = vadd.f32 0.0, %v736
        %738 = vmatmul.bf16.gmra.mxu0 %v557
        %v739 = vpop.f32.mrf.mxu0
        %v740 = vadd.f32 0.0, %v739
        %v741 = vpop.f32.mrf.mxu0
        %v742 = vadd.f32 0.0, %v741
        %743 = vdwg.mxu0
        %v744 = vmul.f32 %v705, %v609
        %v745 = vmul.f32 %v707, %v609
        %v746 = vmul.f32 %v710, %v609
        %v747 = vmul.f32 %v712, %v609
        %v748 = vmul.f32 %v715, %v609
        %v749 = vmul.f32 %v717, %v609
        %v750 = vmul.f32 %v720, %v609
        %v751 = vmul.f32 %v722, %v609
        %v752 = vmul.f32 %v725, %v609
        %v753 = vmul.f32 %v727, %v609
        %v754 = vmul.f32 %v730, %v609
        %v755 = vmul.f32 %v732, %v609
        %v756 = vmul.f32 %v735, %v609
        %v757 = vmul.f32 %v737, %v609
        %v758 = vmul.f32 %v740, %v609
        %v759 = vmul.f32 %v742, %v609
        %v760 = vadd.f32 %v744, %v628
        %v761 = vadd.f32 %v745, %v628
        %v762 = vadd.f32 %v746, %v628
        %v763 = vadd.f32 %v747, %v628
        %v764 = vadd.f32 %v748, %v628
        %v765 = vadd.f32 %v749, %v628
        %v766 = vadd.f32 %v750, %v628
        %v767 = vadd.f32 %v751, %v628
        %v768 = vadd.f32 %v752, %v628
        %v769 = vadd.f32 %v753, %v628
        %v770 = vadd.f32 %v754, %v628
        %v771 = vadd.f32 %v755, %v628
        %v772 = vadd.f32 %v756, %v628
        %v773 = vadd.f32 %v757, %v628
        %v774 = vadd.f32 %v758, %v628
        %v775 = vadd.f32 %v759, %v628
        %v776 = vmax.f32 %v760, 0.0
        %v777 = vmax.f32 %v761, 0.0
        %v778 = vmax.f32 %v762, 0.0
        %v779 = vmax.f32 %v763, 0.0
        %v780 = vmax.f32 %v764, 0.0
        %v781 = vmax.f32 %v765, 0.0
        %v782 = vmax.f32 %v766, 0.0
        %v783 = vmax.f32 %v767, 0.0
        %v784 = vmax.f32 %v768, 0.0
        %v785 = vmax.f32 %v769, 0.0
        %v786 = vmax.f32 %v770, 0.0
        %v787 = vmax.f32 %v771, 0.0
        %v788 = vmax.f32 %v772, 0.0
        %v789 = vmax.f32 %v773, 0.0
        %v790 = vmax.f32 %v774, 0.0
        %v791 = vmax.f32 %v775, 0.0
        %s792 = scalar_lea.vmem [#allocation3], 8
        %793 = vst.msk [vmem:[%s792] sm:$0xff] %vm331, %v776
        %794 = vst.msk [vmem:[%s792 + $0x10] sm:$0xff] %vm331, %v777
        %795 = vst.msk [vmem:[%s792 + $0x20] sm:$0xff] %vm331, %v778
        %796 = vst.msk [vmem:[%s792 + $0x30] sm:$0xff] %vm331, %v779
        %797 = vst.msk [vmem:[%s792 + $0x40] sm:$0xff] %vm331, %v780
        %798 = vst.msk [vmem:[%s792 + $0x50] sm:$0xff] %vm331, %v781
        %799 = vst.msk [vmem:[%s792 + $0x60] sm:$0xff] %vm331, %v782
        %800 = vst.msk [vmem:[%s792 + $0x70] sm:$0xff] %vm331, %v783
        %801 = vst.msk [vmem:[%s792 + $0x80] sm:$0xff] %vm331, %v784
        %802 = vst.msk [vmem:[%s792 + $0x90] sm:$0xff] %vm331, %v785
        %803 = vst.msk [vmem:[%s792 + $0xa0] sm:$0xff] %vm331, %v786
        %804 = vst.msk [vmem:[%s792 + $0xb0] sm:$0xff] %vm331, %v787
        %805 = vst.msk [vmem:[%s792 + $0xc0] sm:$0xff] %vm331, %v788
        %806 = vst.msk [vmem:[%s792 + $0xd0] sm:$0xff] %vm331, %v789
        %807 = vst.msk [vmem:[%s792 + $0xe0] sm:$0xff] %vm331, %v790
        %808 = vst.msk [vmem:[%s792 + $0xf0] sm:$0xff] %vm331, %v791
        %v809 = vld [vmem:[#allocation3] sm:$0xff]
        %v810 = vld [vmem:[#allocation3 + $0x8] sm:$0xff]
        %v811 = vld [vmem:[#allocation3 + $0x10] sm:$0xff]
        %v812 = vld [vmem:[#allocation3 + $0x18] sm:$0xff]
        %v813 = vld [vmem:[#allocation3 + $0x20] sm:$0xff]
        %v814 = vld [vmem:[#allocation3 + $0x28] sm:$0xff]
        %v815 = vld [vmem:[#allocation3 + $0x30] sm:$0xff]
        %v816 = vld [vmem:[#allocation3 + $0x38] sm:$0xff]
        %v817 = vld [vmem:[#allocation3 + $0x40] sm:$0xff]
        %v818 = vld [vmem:[#allocation3 + $0x48] sm:$0xff]
        %v819 = vld [vmem:[#allocation3 + $0x50] sm:$0xff]
        %v820 = vld [vmem:[#allocation3 + $0x58] sm:$0xff]
        %v821 = vld [vmem:[#allocation3 + $0x60] sm:$0xff]
        %v822 = vld [vmem:[#allocation3 + $0x68] sm:$0xff]
        %v823 = vld [vmem:[#allocation3 + $0x70] sm:$0xff]
        %v824 = vld [vmem:[#allocation3 + $0x78] sm:$0xff]
        %v825 = vld [vmem:[#allocation3 + $0x80] sm:$0xff]
        %v826 = vld [vmem:[#allocation3 + $0x88] sm:$0xff]
        %v827 = vld [vmem:[#allocation3 + $0x90] sm:$0xff]
        %v828 = vld [vmem:[#allocation3 + $0x98] sm:$0xff]
        %v829 = vld [vmem:[#allocation3 + $0xa0] sm:$0xff]
        %v830 = vld [vmem:[#allocation3 + $0xa8] sm:$0xff]
        %v831 = vld [vmem:[#allocation3 + $0xb0] sm:$0xff]
        %v832 = vld [vmem:[#allocation3 + $0xb8] sm:$0xff]
        %v833 = vld [vmem:[#allocation3 + $0xc0] sm:$0xff]
        %v834 = vld [vmem:[#allocation3 + $0xc8] sm:$0xff]
        %v835 = vld [vmem:[#allocation3 + $0xd0] sm:$0xff]
        %v836 = vld [vmem:[#allocation3 + $0xd8] sm:$0xff]
        %v837 = vld [vmem:[#allocation3 + $0xe0] sm:$0xff]
        %v838 = vld [vmem:[#allocation3 + $0xe8] sm:$0xff]
        %v839 = vld [vmem:[#allocation3 + $0xf0] sm:$0xff]
        %v840 = vld [vmem:[#allocation3 + $0xf8] sm:$0xff]
        %v841 = vpack.c.bf16 %v810, %v809
        %v842 = vpack.c.bf16 %v812, %v811
        %v843 = vpack.c.bf16 %v814, %v813
        %v844 = vpack.c.bf16 %v816, %v815
        %v845 = vpack.c.bf16 %v818, %v817
        %v846 = vpack.c.bf16 %v820, %v819
        %v847 = vpack.c.bf16 %v822, %v821
        %v848 = vpack.c.bf16 %v824, %v823
        %v849 = vpack.c.bf16 %v826, %v825
        %v850 = vpack.c.bf16 %v828, %v827
        %v851 = vpack.c.bf16 %v830, %v829
        %v852 = vpack.c.bf16 %v832, %v831
        %v853 = vpack.c.bf16 %v834, %v833
        %v854 = vpack.c.bf16 %v836, %v835
        %v855 = vpack.c.bf16 %v838, %v837
        %v856 = vpack.c.bf16 %v840, %v839
        %s857 = scalar_lea.vmem [#allocation8], 2
        %v858 = vld [vmem:[%s857] sm:$0x1]
        %s859 = scalar_lea.vmem [#allocation9], 2
        %v860 = vld [vmem:[%s859] sm:$0x1]
        %s861 = scalar_lea.vmem [#allocation6], 64
        %v862 = vld [vmem:[%s861] sm:$0xf]
        %v863 = vld [vmem:[%s861 + $0x4] sm:$0xf]
        %v864 = vld [vmem:[%s861 + $0x8] sm:$0xf]
        %v865 = vld [vmem:[%s861 + $0xc] sm:$0xf]
        %v870 = vunpack.c.l.b16 %v862
        %v871 = vunpack.c.l.b16 %v863
        %v872 = vunpack.c.l.b16 %v864
        %v873 = vunpack.c.l.b16 %v865
        %v874 = vpack.c.b16 %v871, %v870
        %v875 = vpack.c.b16 %v873, %v872
        %v879 = vsel %vm331, %v841, 0
        %v882 = vsel %vm331, %v842, 0
        %v885 = vsel %vm331, %v843, 0
        %v888 = vsel %vm331, %v844, 0
        %v891 = vsel %vm331, %v845, 0
        %v894 = vsel %vm331, %v846, 0
        %v897 = vsel %vm331, %v847, 0
        %v900 = vsel %vm331, %v848, 0
        %v903 = vsel %vm331, %v849, 0
        %v906 = vsel %vm331, %v850, 0
        %v909 = vsel %vm331, %v851, 0
        %v912 = vsel %vm331, %v852, 0
        %v915 = vsel %vm331, %v853, 0
        %v918 = vsel %vm331, %v854, 0
        %v921 = vsel %vm331, %v855, 0
        %v924 = vsel %vm331, %v856, 0
        %926 = vmatpush.bf16.msra.mxu0 0
        %927 = vmatpush.bf16.msra.mxu0 0
        %928 = vmatpush.bf16.msra.mxu0 0
        %929 = vmatpush.bf16.msra.mxu0 0
        %930 = vmatpush.bf16.msra.mxu0 0
        %931 = vmatpush.bf16.msra.mxu0 0
        %932 = vmatpush.bf16.msra.mxu0 %v875
        %933 = vmatpush.bf16.msra.mxu0 %v874
        %934 = vmatmul.bf16.gmra.mxu0 %v879
        %v935 = vpop.f32.mrf.mxu0
        %v936 = vadd.f32 0.0, %v935
        %v937 = vpop.f32.mrf.mxu0
        %v938 = vadd.f32 0.0, %v937
        %939 = vmatmul.bf16.gmra.mxu0 %v882
        %v940 = vpop.f32.mrf.mxu0
        %v941 = vadd.f32 0.0, %v940
        %v942 = vpop.f32.mrf.mxu0
        %v943 = vadd.f32 0.0, %v942
        %944 = vmatmul.bf16.gmra.mxu0 %v885
        %v945 = vpop.f32.mrf.mxu0
        %v946 = vadd.f32 0.0, %v945
        %v947 = vpop.f32.mrf.mxu0
        %v948 = vadd.f32 0.0, %v947
        %949 = vmatmul.bf16.gmra.mxu0 %v888
        %v950 = vpop.f32.mrf.mxu0
        %v951 = vadd.f32 0.0, %v950
        %v952 = vpop.f32.mrf.mxu0
        %v953 = vadd.f32 0.0, %v952
        %954 = vmatmul.bf16.gmra.mxu0 %v891
        %v955 = vpop.f32.mrf.mxu0
        %v956 = vadd.f32 0.0, %v955
        %v957 = vpop.f32.mrf.mxu0
        %v958 = vadd.f32 0.0, %v957
        %959 = vmatmul.bf16.gmra.mxu0 %v894
        %v960 = vpop.f32.mrf.mxu0
        %v961 = vadd.f32 0.0, %v960
        %v962 = vpop.f32.mrf.mxu0
        %v963 = vadd.f32 0.0, %v962
        %964 = vmatmul.bf16.gmra.mxu0 %v897
        %v965 = vpop.f32.mrf.mxu0
        %v966 = vadd.f32 0.0, %v965
        %v967 = vpop.f32.mrf.mxu0
        %v968 = vadd.f32 0.0, %v967
        %969 = vmatmul.bf16.gmra.mxu0 %v900
        %v970 = vpop.f32.mrf.mxu0
        %v971 = vadd.f32 0.0, %v970
        %v972 = vpop.f32.mrf.mxu0
        %v973 = vadd.f32 0.0, %v972
        %974 = vmatmul.bf16.gmra.mxu0 %v903
        %v975 = vpop.f32.mrf.mxu0
        %v976 = vadd.f32 0.0, %v975
        %v977 = vpop.f32.mrf.mxu0
        %v978 = vadd.f32 0.0, %v977
        %979 = vmatmul.bf16.gmra.mxu0 %v906
        %v980 = vpop.f32.mrf.mxu0
        %v981 = vadd.f32 0.0, %v980
        %v982 = vpop.f32.mrf.mxu0
        %v983 = vadd.f32 0.0, %v982
        %984 = vmatmul.bf16.gmra.mxu0 %v909
        %v985 = vpop.f32.mrf.mxu0
        %v986 = vadd.f32 0.0, %v985
        %v987 = vpop.f32.mrf.mxu0
        %v988 = vadd.f32 0.0, %v987
        %989 = vmatmul.bf16.gmra.mxu0 %v912
        %v990 = vpop.f32.mrf.mxu0
        %v991 = vadd.f32 0.0, %v990
        %v992 = vpop.f32.mrf.mxu0
        %v993 = vadd.f32 0.0, %v992
        %994 = vmatmul.bf16.gmra.mxu0 %v915
        %v995 = vpop.f32.mrf.mxu0
        %v996 = vadd.f32 0.0, %v995
        %v997 = vpop.f32.mrf.mxu0
        %v998 = vadd.f32 0.0, %v997
        %999 = vmatmul.bf16.gmra.mxu0 %v918
        %v1000 = vpop.f32.mrf.mxu0
        %v1001 = vadd.f32 0.0, %v1000
        %v1002 = vpop.f32.mrf.mxu0
        %v1003 = vadd.f32 0.0, %v1002
        %1004 = vmatmul.bf16.gmra.mxu0 %v921
        %v1005 = vpop.f32.mrf.mxu0
        %v1006 = vadd.f32 0.0, %v1005
        %v1007 = vpop.f32.mrf.mxu0
        %v1008 = vadd.f32 0.0, %v1007
        %1009 = vmatmul.bf16.gmra.mxu0 %v924
        %v1010 = vpop.f32.mrf.mxu0
        %v1011 = vadd.f32 0.0, %v1010
        %v1012 = vpop.f32.mrf.mxu0
        %v1013 = vadd.f32 0.0, %v1012
        %1014 = vdwg.mxu0
        %v1016 = vperm.slane %v858, 0
        %v1018 = vmul.f32 %v936, %v1016
        %v1019 = vmul.f32 %v938, %v1016
        %v1020 = vmul.f32 %v941, %v1016
        %v1021 = vmul.f32 %v943, %v1016
        %v1022 = vmul.f32 %v946, %v1016
        %v1023 = vmul.f32 %v948, %v1016
        %v1024 = vmul.f32 %v951, %v1016
        %v1025 = vmul.f32 %v953, %v1016
        %v1026 = vmul.f32 %v956, %v1016
        %v1027 = vmul.f32 %v958, %v1016
        %v1028 = vmul.f32 %v961, %v1016
        %v1029 = vmul.f32 %v963, %v1016
        %v1030 = vmul.f32 %v966, %v1016
        %v1031 = vmul.f32 %v968, %v1016
        %v1032 = vmul.f32 %v971, %v1016
        %v1033 = vmul.f32 %v973, %v1016
        %v1034 = vmul.f32 %v976, %v1016
        %v1035 = vmul.f32 %v978, %v1016
        %v1036 = vmul.f32 %v981, %v1016
        %v1037 = vmul.f32 %v983, %v1016
        %v1038 = vmul.f32 %v986, %v1016
        %v1039 = vmul.f32 %v988, %v1016
        %v1040 = vmul.f32 %v991, %v1016
        %v1041 = vmul.f32 %v993, %v1016
        %v1042 = vmul.f32 %v996, %v1016
        %v1043 = vmul.f32 %v998, %v1016
        %v1044 = vmul.f32 %v1001, %v1016
        %v1045 = vmul.f32 %v1003, %v1016
        %v1046 = vmul.f32 %v1006, %v1016
        %v1047 = vmul.f32 %v1008, %v1016
        %v1048 = vmul.f32 %v1011, %v1016
        %v1049 = vmul.f32 %v1013, %v1016
        %v1051 = vperm.slane %v860, 0
        %v1053 = vadd.f32 %v1018, %v1051
        %v1054 = vadd.f32 %v1019, %v1051
        %v1055 = vadd.f32 %v1020, %v1051
        %v1056 = vadd.f32 %v1021, %v1051
        %v1057 = vadd.f32 %v1022, %v1051
        %v1058 = vadd.f32 %v1023, %v1051
        %v1059 = vadd.f32 %v1024, %v1051
        %v1060 = vadd.f32 %v1025, %v1051
        %v1061 = vadd.f32 %v1026, %v1051
        %v1062 = vadd.f32 %v1027, %v1051
        %v1063 = vadd.f32 %v1028, %v1051
        %v1064 = vadd.f32 %v1029, %v1051
        %v1065 = vadd.f32 %v1030, %v1051
        %v1066 = vadd.f32 %v1031, %v1051
        %v1067 = vadd.f32 %v1032, %v1051
        %v1068 = vadd.f32 %v1033, %v1051
        %v1069 = vadd.f32 %v1034, %v1051
        %v1070 = vadd.f32 %v1035, %v1051
        %v1071 = vadd.f32 %v1036, %v1051
        %v1072 = vadd.f32 %v1037, %v1051
        %v1073 = vadd.f32 %v1038, %v1051
        %v1074 = vadd.f32 %v1039, %v1051
        %v1075 = vadd.f32 %v1040, %v1051
        %v1076 = vadd.f32 %v1041, %v1051
        %v1077 = vadd.f32 %v1042, %v1051
        %v1078 = vadd.f32 %v1043, %v1051
        %v1079 = vadd.f32 %v1044, %v1051
        %v1080 = vadd.f32 %v1045, %v1051
        %v1081 = vadd.f32 %v1046, %v1051
        %v1082 = vadd.f32 %v1047, %v1051
        %v1083 = vadd.f32 %v1048, %v1051
        %v1084 = vadd.f32 %v1049, %v1051
        %v1085 = vmax.f32 %v1053, 0.0
        %v1086 = vmax.f32 %v1054, 0.0
        %v1087 = vmax.f32 %v1055, 0.0
        %v1088 = vmax.f32 %v1056, 0.0
        %v1089 = vmax.f32 %v1057, 0.0
        %v1090 = vmax.f32 %v1058, 0.0
        %v1091 = vmax.f32 %v1059, 0.0
        %v1092 = vmax.f32 %v1060, 0.0
        %v1093 = vmax.f32 %v1061, 0.0
        %v1094 = vmax.f32 %v1062, 0.0
        %v1095 = vmax.f32 %v1063, 0.0
        %v1096 = vmax.f32 %v1064, 0.0
        %v1097 = vmax.f32 %v1065, 0.0
        %v1098 = vmax.f32 %v1066, 0.0
        %v1099 = vmax.f32 %v1067, 0.0
        %v1100 = vmax.f32 %v1068, 0.0
        %v1101 = vmax.f32 %v1069, 0.0
        %v1102 = vmax.f32 %v1070, 0.0
        %v1103 = vmax.f32 %v1071, 0.0
        %v1104 = vmax.f32 %v1072, 0.0
        %v1105 = vmax.f32 %v1073, 0.0
        %v1106 = vmax.f32 %v1074, 0.0
        %v1107 = vmax.f32 %v1075, 0.0
        %v1108 = vmax.f32 %v1076, 0.0
        %v1109 = vmax.f32 %v1077, 0.0
        %v1110 = vmax.f32 %v1078, 0.0
        %v1111 = vmax.f32 %v1079, 0.0
        %v1112 = vmax.f32 %v1080, 0.0
        %v1113 = vmax.f32 %v1081, 0.0
        %v1114 = vmax.f32 %v1082, 0.0
        %v1115 = vmax.f32 %v1083, 0.0
        %v1116 = vmax.f32 %v1084, 0.0
        %1117 = vst.msk [vmem:[%s298] sm:$0xff] %vm331, %v1085
        %1118 = vst.msk [vmem:[%s298 + $0x10] sm:$0xff] %vm331, %v1086
        %1119 = vst.msk [vmem:[%s298 + $0x20] sm:$0xff] %vm331, %v1087
        %1120 = vst.msk [vmem:[%s298 + $0x30] sm:$0xff] %vm331, %v1088
        %1121 = vst.msk [vmem:[%s298 + $0x40] sm:$0xff] %vm331, %v1089
        %1122 = vst.msk [vmem:[%s298 + $0x50] sm:$0xff] %vm331, %v1090
        %1123 = vst.msk [vmem:[%s298 + $0x60] sm:$0xff] %vm331, %v1091
        %1124 = vst.msk [vmem:[%s298 + $0x70] sm:$0xff] %vm331, %v1092
        %1125 = vst.msk [vmem:[%s298 + $0x80] sm:$0xff] %vm331, %v1093
        %1126 = vst.msk [vmem:[%s298 + $0x90] sm:$0xff] %vm331, %v1094
        %1127 = vst.msk [vmem:[%s298 + $0xa0] sm:$0xff] %vm331, %v1095
        %1128 = vst.msk [vmem:[%s298 + $0xb0] sm:$0xff] %vm331, %v1096
        %1129 = vst.msk [vmem:[%s298 + $0xc0] sm:$0xff] %vm331, %v1097
        %1130 = vst.msk [vmem:[%s298 + $0xd0] sm:$0xff] %vm331, %v1098
        %1131 = vst.msk [vmem:[%s298 + $0xe0] sm:$0xff] %vm331, %v1099
        %1132 = vst.msk [vmem:[%s298 + $0xf0] sm:$0xff] %vm331, %v1100
        %1133 = vst.msk [vmem:[%s298 + $0x100] sm:$0xff] %vm331, %v1101
        %1134 = vst.msk [vmem:[%s298 + $0x110] sm:$0xff] %vm331, %v1102
        %1135 = vst.msk [vmem:[%s298 + $0x120] sm:$0xff] %vm331, %v1103
        %1136 = vst.msk [vmem:[%s298 + $0x130] sm:$0xff] %vm331, %v1104
        %1137 = vst.msk [vmem:[%s298 + $0x140] sm:$0xff] %vm331, %v1105
        %1138 = vst.msk [vmem:[%s298 + $0x150] sm:$0xff] %vm331, %v1106
        %1139 = vst.msk [vmem:[%s298 + $0x160] sm:$0xff] %vm331, %v1107
        %1140 = vst.msk [vmem:[%s298 + $0x170] sm:$0xff] %vm331, %v1108
        %1141 = vst.msk [vmem:[%s298 + $0x180] sm:$0xff] %vm331, %v1109
        %1142 = vst.msk [vmem:[%s298 + $0x190] sm:$0xff] %vm331, %v1110
        %1143 = vst.msk [vmem:[%s298 + $0x1a0] sm:$0xff] %vm331, %v1111
        %1144 = vst.msk [vmem:[%s298 + $0x1b0] sm:$0xff] %vm331, %v1112
        %1145 = vst.msk [vmem:[%s298 + $0x1c0] sm:$0xff] %vm331, %v1113
        %1146 = vst.msk [vmem:[%s298 + $0x1d0] sm:$0xff] %vm331, %v1114
        %1147 = vst.msk [vmem:[%s298 + $0x1e0] sm:$0xff] %vm331, %v1115
        %1148 = vst.msk [vmem:[%s298 + $0x1f0] sm:$0xff] %vm331, %v1116
        %s1149 = scalar_lea.vmem [#allocation6], 80
        %v1150 = vld [vmem:[%s1149] sm:$0xf]
        %v1151 = vld [vmem:[%s1149 + $0x4] sm:$0xf]
        %v1152 = vld [vmem:[%s1149 + $0x8] sm:$0xf]
        %v1153 = vld [vmem:[%s1149 + $0xc] sm:$0xf]
        %v1158 = vunpack.c.l.b16 %v1150
        %v1159 = vunpack.c.l.b16 %v1151
        %v1160 = vunpack.c.l.b16 %v1152
        %v1161 = vunpack.c.l.b16 %v1153
        %v1162 = vpack.c.b16 %v1159, %v1158
        %v1163 = vpack.c.b16 %v1161, %v1160
        %1166 = vmatpush.bf16.msra.mxu0 0
        %1167 = vmatpush.bf16.msra.mxu0 0
        %1168 = vmatpush.bf16.msra.mxu0 0
        %1169 = vmatpush.bf16.msra.mxu0 0
        %1170 = vmatpush.bf16.msra.mxu0 0
        %1171 = vmatpush.bf16.msra.mxu0 0
        %1172 = vmatpush.bf16.msra.mxu0 %v1163
        %1173 = vmatpush.bf16.msra.mxu0 %v1162
        %1174 = vmatmul.bf16.gmra.mxu0 %v879
        %v1175 = vpop.f32.mrf.mxu0
        %v1176 = vadd.f32 0.0, %v1175
        %v1177 = vpop.f32.mrf.mxu0
        %v1178 = vadd.f32 0.0, %v1177
        %1179 = vmatmul.bf16.gmra.mxu0 %v882
        %v1180 = vpop.f32.mrf.mxu0
        %v1181 = vadd.f32 0.0, %v1180
        %v1182 = vpop.f32.mrf.mxu0
        %v1183 = vadd.f32 0.0, %v1182
        %1184 = vmatmul.bf16.gmra.mxu0 %v885
        %v1185 = vpop.f32.mrf.mxu0
        %v1186 = vadd.f32 0.0, %v1185
        %v1187 = vpop.f32.mrf.mxu0
        %v1188 = vadd.f32 0.0, %v1187
        %1189 = vmatmul.bf16.gmra.mxu0 %v888
        %v1190 = vpop.f32.mrf.mxu0
        %v1191 = vadd.f32 0.0, %v1190
        %v1192 = vpop.f32.mrf.mxu0
        %v1193 = vadd.f32 0.0, %v1192
        %1194 = vmatmul.bf16.gmra.mxu0 %v891
        %v1195 = vpop.f32.mrf.mxu0
        %v1196 = vadd.f32 0.0, %v1195
        %v1197 = vpop.f32.mrf.mxu0
        %v1198 = vadd.f32 0.0, %v1197
        %1199 = vmatmul.bf16.gmra.mxu0 %v894
        %v1200 = vpop.f32.mrf.mxu0
        %v1201 = vadd.f32 0.0, %v1200
        %v1202 = vpop.f32.mrf.mxu0
        %v1203 = vadd.f32 0.0, %v1202
        %1204 = vmatmul.bf16.gmra.mxu0 %v897
        %v1205 = vpop.f32.mrf.mxu0
        %v1206 = vadd.f32 0.0, %v1205
        %v1207 = vpop.f32.mrf.mxu0
        %v1208 = vadd.f32 0.0, %v1207
        %1209 = vmatmul.bf16.gmra.mxu0 %v900
        %v1210 = vpop.f32.mrf.mxu0
        %v1211 = vadd.f32 0.0, %v1210
        %v1212 = vpop.f32.mrf.mxu0
        %v1213 = vadd.f32 0.0, %v1212
        %1214 = vmatmul.bf16.gmra.mxu0 %v903
        %v1215 = vpop.f32.mrf.mxu0
        %v1216 = vadd.f32 0.0, %v1215
        %v1217 = vpop.f32.mrf.mxu0
        %v1218 = vadd.f32 0.0, %v1217
        %1219 = vmatmul.bf16.gmra.mxu0 %v906
        %v1220 = vpop.f32.mrf.mxu0
        %v1221 = vadd.f32 0.0, %v1220
        %v1222 = vpop.f32.mrf.mxu0
        %v1223 = vadd.f32 0.0, %v1222
        %1224 = vmatmul.bf16.gmra.mxu0 %v909
        %v1225 = vpop.f32.mrf.mxu0
        %v1226 = vadd.f32 0.0, %v1225
        %v1227 = vpop.f32.mrf.mxu0
        %v1228 = vadd.f32 0.0, %v1227
        %1229 = vmatmul.bf16.gmra.mxu0 %v912
        %v1230 = vpop.f32.mrf.mxu0
        %v1231 = vadd.f32 0.0, %v1230
        %v1232 = vpop.f32.mrf.mxu0
        %v1233 = vadd.f32 0.0, %v1232
        %1234 = vmatmul.bf16.gmra.mxu0 %v915
        %v1235 = vpop.f32.mrf.mxu0
        %v1236 = vadd.f32 0.0, %v1235
        %v1237 = vpop.f32.mrf.mxu0
        %v1238 = vadd.f32 0.0, %v1237
        %1239 = vmatmul.bf16.gmra.mxu0 %v918
        %v1240 = vpop.f32.mrf.mxu0
        %v1241 = vadd.f32 0.0, %v1240
        %v1242 = vpop.f32.mrf.mxu0
        %v1243 = vadd.f32 0.0, %v1242
        %1244 = vmatmul.bf16.gmra.mxu0 %v921
        %v1245 = vpop.f32.mrf.mxu0
        %v1246 = vadd.f32 0.0, %v1245
        %v1247 = vpop.f32.mrf.mxu0
        %v1248 = vadd.f32 0.0, %v1247
        %1249 = vmatmul.bf16.gmra.mxu0 %v924
        %v1250 = vpop.f32.mrf.mxu0
        %v1251 = vadd.f32 0.0, %v1250
        %v1252 = vpop.f32.mrf.mxu0
        %v1253 = vadd.f32 0.0, %v1252
        %1254 = vdwg.mxu0
        %v1255 = vmul.f32 %v1176, %v1016
        %v1256 = vmul.f32 %v1178, %v1016
        %v1257 = vmul.f32 %v1181, %v1016
        %v1258 = vmul.f32 %v1183, %v1016
        %v1259 = vmul.f32 %v1186, %v1016
        %v1260 = vmul.f32 %v1188, %v1016
        %v1261 = vmul.f32 %v1191, %v1016
        %v1262 = vmul.f32 %v1193, %v1016
        %v1263 = vmul.f32 %v1196, %v1016
        %v1264 = vmul.f32 %v1198, %v1016
        %v1265 = vmul.f32 %v1201, %v1016
        %v1266 = vmul.f32 %v1203, %v1016
        %v1267 = vmul.f32 %v1206, %v1016
        %v1268 = vmul.f32 %v1208, %v1016
        %v1269 = vmul.f32 %v1211, %v1016
        %v1270 = vmul.f32 %v1213, %v1016
        %v1271 = vmul.f32 %v1216, %v1016
        %v1272 = vmul.f32 %v1218, %v1016
        %v1273 = vmul.f32 %v1221, %v1016
        %v1274 = vmul.f32 %v1223, %v1016
        %v1275 = vmul.f32 %v1226, %v1016
        %v1276 = vmul.f32 %v1228, %v1016
        %v1277 = vmul.f32 %v1231, %v1016
        %v1278 = vmul.f32 %v1233, %v1016
        %v1279 = vmul.f32 %v1236, %v1016
        %v1280 = vmul.f32 %v1238, %v1016
        %v1281 = vmul.f32 %v1241, %v1016
        %v1282 = vmul.f32 %v1243, %v1016
        %v1283 = vmul.f32 %v1246, %v1016
        %v1284 = vmul.f32 %v1248, %v1016
        %v1285 = vmul.f32 %v1251, %v1016
        %v1286 = vmul.f32 %v1253, %v1016
        %v1287 = vadd.f32 %v1255, %v1051
        %v1288 = vadd.f32 %v1256, %v1051
        %v1289 = vadd.f32 %v1257, %v1051
        %v1290 = vadd.f32 %v1258, %v1051
        %v1291 = vadd.f32 %v1259, %v1051
        %v1292 = vadd.f32 %v1260, %v1051
        %v1293 = vadd.f32 %v1261, %v1051
        %v1294 = vadd.f32 %v1262, %v1051
        %v1295 = vadd.f32 %v1263, %v1051
        %v1296 = vadd.f32 %v1264, %v1051
        %v1297 = vadd.f32 %v1265, %v1051
        %v1298 = vadd.f32 %v1266, %v1051
        %v1299 = vadd.f32 %v1267, %v1051
        %v1300 = vadd.f32 %v1268, %v1051
        %v1301 = vadd.f32 %v1269, %v1051
        %v1302 = vadd.f32 %v1270, %v1051
        %v1303 = vadd.f32 %v1271, %v1051
        %v1304 = vadd.f32 %v1272, %v1051
        %v1305 = vadd.f32 %v1273, %v1051
        %v1306 = vadd.f32 %v1274, %v1051
        %v1307 = vadd.f32 %v1275, %v1051
        %v1308 = vadd.f32 %v1276, %v1051
        %v1309 = vadd.f32 %v1277, %v1051
        %v1310 = vadd.f32 %v1278, %v1051
        %v1311 = vadd.f32 %v1279, %v1051
        %v1312 = vadd.f32 %v1280, %v1051
        %v1313 = vadd.f32 %v1281, %v1051
        %v1314 = vadd.f32 %v1282, %v1051
        %v1315 = vadd.f32 %v1283, %v1051
        %v1316 = vadd.f32 %v1284, %v1051
        %v1317 = vadd.f32 %v1285, %v1051
        %v1318 = vadd.f32 %v1286, %v1051
        %v1319 = vmax.f32 %v1287, 0.0
        %v1320 = vmax.f32 %v1288, 0.0
        %v1321 = vmax.f32 %v1289, 0.0
        %v1322 = vmax.f32 %v1290, 0.0
        %v1323 = vmax.f32 %v1291, 0.0
        %v1324 = vmax.f32 %v1292, 0.0
        %v1325 = vmax.f32 %v1293, 0.0
        %v1326 = vmax.f32 %v1294, 0.0
        %v1327 = vmax.f32 %v1295, 0.0
        %v1328 = vmax.f32 %v1296, 0.0
        %v1329 = vmax.f32 %v1297, 0.0
        %v1330 = vmax.f32 %v1298, 0.0
        %v1331 = vmax.f32 %v1299, 0.0
        %v1332 = vmax.f32 %v1300, 0.0
        %v1333 = vmax.f32 %v1301, 0.0
        %v1334 = vmax.f32 %v1302, 0.0
        %v1335 = vmax.f32 %v1303, 0.0
        %v1336 = vmax.f32 %v1304, 0.0
        %v1337 = vmax.f32 %v1305, 0.0
        %v1338 = vmax.f32 %v1306, 0.0
        %v1339 = vmax.f32 %v1307, 0.0
        %v1340 = vmax.f32 %v1308, 0.0
        %v1341 = vmax.f32 %v1309, 0.0
        %v1342 = vmax.f32 %v1310, 0.0
        %v1343 = vmax.f32 %v1311, 0.0
        %v1344 = vmax.f32 %v1312, 0.0
        %v1345 = vmax.f32 %v1313, 0.0
        %v1346 = vmax.f32 %v1314, 0.0
        %v1347 = vmax.f32 %v1315, 0.0
        %v1348 = vmax.f32 %v1316, 0.0
        %v1349 = vmax.f32 %v1317, 0.0
        %v1350 = vmax.f32 %v1318, 0.0
        %s1351 = scalar_lea.vmem %s298, 8
        %1352 = vst.msk [vmem:[%s1351] sm:$0xff] %vm331, %v1319
        %1353 = vst.msk [vmem:[%s1351 + $0x10] sm:$0xff] %vm331, %v1320
        %1354 = vst.msk [vmem:[%s1351 + $0x20] sm:$0xff] %vm331, %v1321
        %1355 = vst.msk [vmem:[%s1351 + $0x30] sm:$0xff] %vm331, %v1322
        %1356 = vst.msk [vmem:[%s1351 + $0x40] sm:$0xff] %vm331, %v1323
        %1357 = vst.msk [vmem:[%s1351 + $0x50] sm:$0xff] %vm331, %v1324
        %1358 = vst.msk [vmem:[%s1351 + $0x60] sm:$0xff] %vm331, %v1325
        %1359 = vst.msk [vmem:[%s1351 + $0x70] sm:$0xff] %vm331, %v1326
        %1360 = vst.msk [vmem:[%s1351 + $0x80] sm:$0xff] %vm331, %v1327
        %1361 = vst.msk [vmem:[%s1351 + $0x90] sm:$0xff] %vm331, %v1328
        %1362 = vst.msk [vmem:[%s1351 + $0xa0] sm:$0xff] %vm331, %v1329
        %1363 = vst.msk [vmem:[%s1351 + $0xb0] sm:$0xff] %vm331, %v1330
        %1364 = vst.msk [vmem:[%s1351 + $0xc0] sm:$0xff] %vm331, %v1331
        %1365 = vst.msk [vmem:[%s1351 + $0xd0] sm:$0xff] %vm331, %v1332
        %1366 = vst.msk [vmem:[%s1351 + $0xe0] sm:$0xff] %vm331, %v1333
        %1367 = vst.msk [vmem:[%s1351 + $0xf0] sm:$0xff] %vm331, %v1334
        %1368 = vst.msk [vmem:[%s1351 + $0x100] sm:$0xff] %vm331, %v1335
        %1369 = vst.msk [vmem:[%s1351 + $0x110] sm:$0xff] %vm331, %v1336
        %1370 = vst.msk [vmem:[%s1351 + $0x120] sm:$0xff] %vm331, %v1337
        %1371 = vst.msk [vmem:[%s1351 + $0x130] sm:$0xff] %vm331, %v1338
        %1372 = vst.msk [vmem:[%s1351 + $0x140] sm:$0xff] %vm331, %v1339
        %1373 = vst.msk [vmem:[%s1351 + $0x150] sm:$0xff] %vm331, %v1340
        %1374 = vst.msk [vmem:[%s1351 + $0x160] sm:$0xff] %vm331, %v1341
        %1375 = vst.msk [vmem:[%s1351 + $0x170] sm:$0xff] %vm331, %v1342
        %1376 = vst.msk [vmem:[%s1351 + $0x180] sm:$0xff] %vm331, %v1343
        %1377 = vst.msk [vmem:[%s1351 + $0x190] sm:$0xff] %vm331, %v1344
        %1378 = vst.msk [vmem:[%s1351 + $0x1a0] sm:$0xff] %vm331, %v1345
        %1379 = vst.msk [vmem:[%s1351 + $0x1b0] sm:$0xff] %vm331, %v1346
        %1380 = vst.msk [vmem:[%s1351 + $0x1c0] sm:$0xff] %vm331, %v1347
        %1381 = vst.msk [vmem:[%s1351 + $0x1d0] sm:$0xff] %vm331, %v1348
        %1382 = vst.msk [vmem:[%s1351 + $0x1e0] sm:$0xff] %vm331, %v1349
        %1383 = vst.msk [vmem:[%s1351 + $0x1f0] sm:$0xff] %vm331, %v1350
        %s1384 = smul.u32 32, %s25
        %p1385 = scmp.lt.s32.totalorder %s24, 1
        %s1386 = scalar_select %p1385, %s24, 1
        %p1387 = scmp.lt.s32.totalorder %s1384, 31
        %s1388 = scalar_select %p1387, %s1384, 31
        %s1389 = smul.addr %s1388, 2
        %s1390 = smul.addr %s1386, 64
        %s1391 = sadd.s32 %s1389, %s1390
        %s1392 = smul.addr %s1391, 8
        %s1393 = scalar_lea.vmem %s4, %s1392
        // Predicated region
        $region53: #{uphead8x_forward.1} parent=35 // pred_check
          %p1394 = pneg %p143
        $region54: #{uphead8x_forward.1} parent=35 // pred_check_branch
          %1396 = sbr.rel (%p1394) target = $region56
        $region55: #{uphead8x_forward.1} parent=35 // pred_region
          %s1397 = smul.u32 32, %s25
        $region56: #{uphead8x_forward.1} parent=35 // pred_fallthru
          _
      $region36: #{uphead8x_forward.1} parent=5 // pred_fallthru
        _
      %p1398 = scmp.le.s32.totalorder 2, %s15
      // Predicated region
      $region57: #{uphead8x_forward.1} parent=5 // pred_check
        %p1399 = pneg %p1398
      $region58: #{uphead8x_forward.1} parent=5 // pred_check_branch
        %1401 = sbr.rel (%p1399) target = $region60
      $region59: #{uphead8x_forward.1} parent=5 // pred_region
        %s1402 = ssub.s32 %s15, 2
        // Predicated region
        $region61: #{uphead8x_forward.1} parent=59 // pred_check
          %p1403 = pneg %p149
        $region62: #{uphead8x_forward.1} parent=59 // pred_check_branch
          %1405 = sbr.rel (%p1403) target = $region64
        $region63: #{uphead8x_forward.1} parent=59 // pred_region
          %s1406 = smul.u32 32, %s27
          %p1407 = scmp.lt.s32.totalorder %s26, 1
          %s1408 = scalar_select %p1407, %s26, 1
          %p1409 = scmp.lt.s32.totalorder %s1406, 31
          %s1410 = scalar_select %p1409, %s1406, 31
          %s1411 = smul.addr %s1410, 2
          %s1412 = smul.addr %s1408, 64
          %s1413 = sadd.s32 %s1411, %s1412
          %s1414 = smul.addr %s1413, 8
          %s1415 = scalar_lea.vmem %s4, %s1414
        $region64: #{uphead8x_forward.1} parent=59 // pred_fallthru
          _
      $region60: #{uphead8x_forward.1} parent=5 // pred_fallthru
        _
    $region6: #{uphead8x_forward.1} parent=1 // loop_footer
      %s19 = sadd.s32 1, %s15
    $region7: #{uphead8x_forward.1} parent=1 // loop_footer_branch
      %14 = sbr.rel target = $region3
    $region8: #{uphead8x_forward.1} parent=1 // loop_exit
      _
    %1416 = vsyncpa [#allocation5], 1
    %s1417 = scalar_lea.sflag [#allocation5], 1
    %1418 = vsyncpa %s1417, 1
    %1419 = vsyncpa [#allocation7], 1
    %1420 = vsyncpa [#allocation10], 1

</llo_original>
